<compile_context>
chip_gen: v6e
topology: v6e:2x2x1
jax: 0.10.0
libtpu: 0.0.40
codegen_flags: <defaults>
</compile_context>

<pallas_src>
import functools

import jax
import jax.numpy as jnp
from jax import lax
from jax.experimental import pallas as pl
from jax.experimental.pallas import tpu as pltpu

LANE = 128
_MIB = 1024 * 1024
_FUSED_MAX_NODES = 2048  # padded working set ~11 MiB at 2048 -> fits every gen


def _round_up(x, m):
    return ((x + m - 1) // m) * m


def _pad2(arr, rows, cols):
    r, c = arr.shape
    return jnp.pad(arr, ((0, rows - r), (0, cols - c)))


def _plan(n, force_tiled=False):
    """Choose padded node count and tiling for a graph with n nodes."""
    if n <= _FUSED_MAX_NODES and not force_tiled:
        return {"fused": True, "n_pad": _round_up(n, LANE), "tile": None}
    tile = 256
    if _round_up(n, tile) // tile < 2:  # keep >= 2 row tiles for v7x megacore
        tile = 128
    return {"fused": False, "n_pad": _round_up(n, tile), "tile": tile}


def _vmem_limit_bytes(block_bytes):
    """Double-buffered block estimate, clamped to half the chip's VMEM."""
    try:
        cap = int(getattr(pltpu.get_tpu_info(), "vmem_capacity_bytes", 64 * _MIB))
    except Exception:  # pragma: no cover - conservative fallback
        cap = 64 * _MIB
    est = int(1.5 * sum(2 * b for b in block_bytes)) + 4 * _MIB
    return int(max(16 * _MIB, min(est, cap // 2)))


def _masked_log_softmax(z, num_classes):
    """log_softmax over the first num_classes lanes; padded lanes -> 0."""
    cols = lax.broadcasted_iota(jnp.int32, z.shape, 1)
    mask = cols < num_classes
    zm = jnp.where(mask, z, jnp.float32(-1e30))
    m = jnp.max(zm, axis=1, keepdims=True)
    zs = zm - m
    p = jnp.where(mask, jnp.exp(zs), 0.0)
    lse = jnp.log(jnp.sum(p, axis=1, keepdims=True))
    return jnp.where(mask, zs - lse, 0.0)


# ----------------------------- kernels --------------------------------------


def gcn_fused_kernel(a_ref, x_ref, w1_ref, b1_ref, w2_ref, b2_ref, out_ref, *,
                     num_classes):
    """Whole 2-layer forward for a VMEM-resident graph (A read once)."""
    # Layer 1: h1 = relu(A @ (X @ W1) + b1)
    xw1 = jnp.dot(x_ref[...], w1_ref[...], preferred_element_type=jnp.float32)
    h1 = jnp.dot(a_ref[...], xw1.astype(jnp.bfloat16),
                 preferred_element_type=jnp.float32)
    h1 = jnp.maximum(h1 + b1_ref[...], 0.0)
    # Layer 2: z = A @ (h1 @ W2) + b2
    hw2 = jnp.dot(h1.astype(jnp.bfloat16), w2_ref[...],
                  preferred_element_type=jnp.float32)
    z = jnp.dot(a_ref[...], hw2.astype(jnp.bfloat16),
                preferred_element_type=jnp.float32) + b2_ref[...]
    out_ref[...] = _masked_log_softmax(z, num_classes)


def gcn_layer_kernel(a_ref, x_ref, w_ref, b_ref, out_ref, acc_ref, *,
                     activation, num_classes=0):
    """One GCNConv layer, row (i) x contraction (k) tiled:
         acc[i] += A[i,k] @ (X[k] @ W);  finalize with bias + activation."""
    k = pl.program_id(1)

    @pl.when(k == 0)
    def _():
        acc_ref[...] = jnp.zeros_like(acc_ref)

    # Fused feature transform for this contraction block (cheap vs A @ XW).
    xw = jnp.dot(x_ref[...], w_ref[...], preferred_element_type=jnp.float32)
    acc_ref[...] += jnp.dot(a_ref[...], xw.astype(jnp.bfloat16),
                            preferred_element_type=jnp.float32)

    @pl.when(k == pl.num_programs(1) - 1)
    def _():
        z = acc_ref[...] + b_ref[...]
        if activation == "relu":
            out_ref[...] = jnp.maximum(z, 0.0).astype(out_ref.dtype)
        else:  # log_softmax over the first num_classes lanes
            out_ref[...] = _masked_log_softmax(z, num_classes).astype(out_ref.dtype)


# --------------------------- pallas_call wrappers ----------------------------


def _gcn_forward_fused(a_p, x_p, w1_p, b1_p, w2_p, b2_p, num_classes):
    n_pad, f_pad = x_p.shape
    h_pad = w1_p.shape[1]
    c_pad = w2_p.shape[1]
    blocks = [n_pad * n_pad * 2, n_pad * f_pad * 2, f_pad * h_pad * 2,
              h_pad * 4, h_pad * c_pad * 2, c_pad * 4,
              n_pad * h_pad * 4, n_pad * h_pad * 4, n_pad * c_pad * 4]
    cost = pl.CostEstimate(
        flops=2 * n_pad * (f_pad * h_pad + n_pad * h_pad
                           + h_pad * c_pad + n_pad * c_pad),
        transcendentals=n_pad * c_pad,
        bytes_accessed=(n_pad * n_pad * 2 + n_pad * f_pad * 2
                        + f_pad * h_pad * 2 + h_pad * 4
                        + h_pad * c_pad * 2 + c_pad * 4 + n_pad * c_pad * 4),
    )
    kernel = functools.partial(gcn_fused_kernel, num_classes=num_classes)
    return pl.pallas_call(
        kernel,
        out_shape=jax.ShapeDtypeStruct((n_pad, c_pad), jnp.float32),
        grid=(1,),
        in_specs=[
            pl.BlockSpec((n_pad, n_pad), lambda i: (0, 0)),  # A (read once)
            pl.BlockSpec((n_pad, f_pad), lambda i: (0, 0)),  # X
            pl.BlockSpec((f_pad, h_pad), lambda i: (0, 0)),  # W1
            pl.BlockSpec((1, h_pad), lambda i: (0, 0)),      # b1
            pl.BlockSpec((h_pad, c_pad), lambda i: (0, 0)),  # W2
            pl.BlockSpec((1, c_pad), lambda i: (0, 0)),      # b2
        ],
        out_specs=pl.BlockSpec((n_pad, c_pad), lambda i: (0, 0)),
        compiler_params=pltpu.CompilerParams(
            dimension_semantics=("arbitrary",),
            vmem_limit_bytes=_vmem_limit_bytes(blocks),
        ),
        cost_estimate=cost,
    )(a_p, x_p, w1_p, b1_p, w2_p, b2_p)


def _gcn_layer_tiled(a_p, x_p, w_p, b_p, tile, activation, num_classes,
                     out_dtype):
    n_pad = a_p.shape[0]
    f_pad = x_p.shape[1]
    fo_pad = w_p.shape[1]
    tm = tk = tile
    grid = (n_pad // tm, n_pad // tk)
    out_isz = jnp.dtype(out_dtype).itemsize
    block_bytes = [tm * tk * 2, tk * f_pad * 2, f_pad * fo_pad * 2,
                   fo_pad * 4, tm * fo_pad * out_isz, tm * fo_pad * 4]
    n_row_tiles = grid[0]
    cost = pl.CostEstimate(
        flops=2 * n_pad * n_pad * fo_pad
        + 2 * n_row_tiles * n_pad * f_pad * fo_pad,
        transcendentals=(n_pad * fo_pad if activation == "log_softmax" else 0),
        bytes_accessed=(n_pad * n_pad * 2 + n_row_tiles * n_pad * f_pad * 2
                        + f_pad * fo_pad * 2 + fo_pad * 4
                        + n_pad * fo_pad * out_isz),
    )
    kernel = functools.partial(gcn_layer_kernel, activation=activation,
                               num_classes=num_classes)
    return pl.pallas_call(
        kernel,
        out_shape=jax.ShapeDtypeStruct((n_pad, fo_pad), out_dtype),
        grid=grid,
        in_specs=[
            pl.BlockSpec((tm, tk), lambda i, k: (i, k)),         # A block
            pl.BlockSpec((tk, f_pad), lambda i, k: (k, 0)),      # X rows (for XW)
            pl.BlockSpec((f_pad, fo_pad), lambda i, k: (0, 0)),  # W (resident)
            pl.BlockSpec((1, fo_pad), lambda i, k: (0, 0)),      # bias (resident)
        ],
        out_specs=pl.BlockSpec((tm, fo_pad), lambda i, k: (i, 0)),
        scratch_shapes=[pltpu.VMEM((tm, fo_pad), jnp.float32)],
        compiler_params=pltpu.CompilerParams(
            dimension_semantics=("parallel", "arbitrary"),
            vmem_limit_bytes=_vmem_limit_bytes(block_bytes),
        ),
        cost_estimate=cost,
    )(a_p, x_p, w_p, b_p)


# ------------------------------ public API -----------------------------------


def prepare_adjacency(a_hat, *, force_tiled=False):
    """Pad + bf16-cast the dense normalized adjacency ONCE per graph
    (hoisted out of the per-forward path; aggregation is HBM-bound on A)."""
    n = a_hat.shape[0]
    n_pad = _plan(n, force_tiled)["n_pad"]
    return _pad2(a_hat, n_pad, n_pad).astype(jnp.bfloat16)


@functools.partial(jax.jit, static_argnames=("force_tiled",))
def gcn_forward(a_p, x, w1, b1, w2, b2, force_tiled=False):
    """Full 2-layer GCN forward.
      a_p : prepared adjacency from prepare_adjacency (same force_tiled flag)
      x   : [N, F] float32 node features
    Returns [N, C] float32 log-probabilities."""
    n, f = x.shape
    h = w1.shape[1]
    c = w2.shape[1]
    plan = _plan(n, force_tiled)
    n_pad = plan["n_pad"]
    assert a_p.shape == (n_pad, n_pad) and a_p.dtype == jnp.bfloat16, (
        "a_p must come from prepare_adjacency with the same force_tiled flag")

    f_pad = _round_up(f, LANE)
    h_pad = _round_up(h, LANE)
    c_pad = _round_up(c, LANE)

    x_p = _pad2(x, n_pad, f_pad).astype(jnp.bfloat16)
    w1_p = _pad2(w1, f_pad, h_pad).astype(jnp.bfloat16)
    b1_p = _pad2(b1.reshape(1, -1), 1, h_pad).astype(jnp.float32)
    w2_p = _pad2(w2, h_pad, c_pad).astype(jnp.bfloat16)
    b2_p = _pad2(b2.reshape(1, -1), 1, c_pad).astype(jnp.float32)

    if plan["fused"]:
        out = _gcn_forward_fused(a_p, x_p, w1_p, b1_p, w2_p, b2_p, c)
    else:
        h1 = _gcn_layer_tiled(a_p, x_p, w1_p, b1_p, plan["tile"],
                              "relu", 0, jnp.bfloat16)
        out = _gcn_layer_tiled(a_p, h1, w2_p, b2_p, plan["tile"],
                               "log_softmax", c, jnp.float32)
    return out[:n, :c]


def build_normalized_adjacency(edge_index, num_nodes):
    """Dense D^{-1/2} (A + I) D^{-1/2}; self-loops set (not added), matching
    torch_geometric's add_remaining_self_loops even for explicit self-loops."""
    src, dst = edge_index[0], edge_index[1]
    a = jnp.zeros((num_nodes, num_nodes), jnp.float32)
    a = a.at[src, dst].set(1.0)
    a = a.at[dst, src].set(1.0)  # undirected
    diag = jnp.arange(num_nodes)
    a = a.at[diag, diag].set(1.0)  # remaining self loops
    deg = jnp.sum(a, axis=1)
    dinv = jnp.where(deg > 0, 1.0 / jnp.sqrt(deg), 0.0)
    return dinv[:, None] * a * dinv[None, :]


if __name__ == "__main__":
    key = jax.random.PRNGKey(0)
    k_x, k_e, k_w1, k_b1, k_w2, k_b2 = jax.random.split(key, 6)

    N = 200       # nodes (pads to 256)
    F_IN = 8      # num_features
    HID = 16      # GCN hidden (fixed at 16 in the module)
    C = 7         # num_classes

    x = jax.random.normal(k_x, (N, F_IN), dtype=jnp.float32)

    E = 800
    edge_index = jax.random.randint(k_e, (2, E), 0, N, dtype=jnp.int32)
    a_hat = build_normalized_adjacency(edge_index, N)

    lim1 = (6.0 / (F_IN + HID)) ** 0.5
    lim2 = (6.0 / (HID + C)) ** 0.5
    w1 = jax.random.uniform(k_w1, (F_IN, HID), jnp.float32, -lim1, lim1)
    b1 = jax.random.uniform(k_b1, (HID,), jnp.float32, -0.1, 0.1)
    w2 = jax.random.uniform(k_w2, (HID, C), jnp.float32, -lim2, lim2)
    b2 = jax.random.uniform(k_b2, (C,), jnp.float32, -0.1, 0.1)

    # Pad + cast A once per graph (hoisted out of the forward path).
    a_fused = prepare_adjacency(a_hat)
    a_tiled = prepare_adjacency(a_hat, force_tiled=True)

    # Primary (fully fused, single pallas_call) path.
    out = gcn_forward(a_fused, x, w1, b1, w2, b2)
    out = jax.block_until_ready(out)

    # Also exercise the large-graph tiled path (2 calls, K-accumulated).
    out_tiled = gcn_forward(a_tiled, x, w1, b1, w2, b2, force_tiled=True)
    out_tiled = jax.block_until_ready(out_tiled)

    # --- references ---------------------------------------------------------
    # (a) precision-matched reference: same bf16 rounding points as the kernel.
    ab = a_hat.astype(jnp.bfloat16)
    xb = x.astype(jnp.bfloat16)
    w1b = w1.astype(jnp.bfloat16)
    w2b = w2.astype(jnp.bfloat16)
    xw1 = jnp.dot(xb, w1b, preferred_element_type=jnp.float32).astype(jnp.bfloat16)
    h1r = jnp.maximum(jnp.dot(ab, xw1, preferred_element_type=jnp.float32) + b1, 0.0)
    hw2 = jnp.dot(h1r.astype(jnp.bfloat16), w2b,
                  preferred_element_type=jnp.float32).astype(jnp.bfloat16)
    zr = jnp.dot(ab, hw2, preferred_element_type=jnp.float32) + b2
    ref_bf16 = jax.nn.log_softmax(zr, axis=1)

    # (b) pure f32 reference (module semantics), loose tolerance.
    h_f32 = jnp.maximum(a_hat @ (x @ w1) + b1, 0.0)
    ref_f32 = jax.nn.log_softmax(a_hat @ (h_f32 @ w2) + b2, axis=1)

    assert out.shape == (N, C)
    assert out_tiled.shape == (N, C)
    assert jnp.allclose(out, ref_bf16, atol=2e-2, rtol=2e-2), "fused path mismatch"
    assert jnp.allclose(out_tiled, ref_bf16, atol=2e-2, rtol=2e-2), "tiled path mismatch"
    assert jnp.allclose(out, ref_f32, atol=1e-1, rtol=1e-1), "semantic mismatch"

    print("KERNEL_OK")
</pallas_src>

<mosaic_0001>
module attributes {stable_mosaic.version = 11 : i64} {
  func.func @gcn_fused_kernel(%arg0: i32, %arg1: memref<256x256xbf16, #tpu.memory_space<vmem>>, %arg2: memref<256x128xbf16, #tpu.memory_space<vmem>>, %arg3: memref<128x128xbf16, #tpu.memory_space<vmem>>, %arg4: memref<1x128xf32, #tpu.memory_space<vmem>>, %arg5: memref<128x128xbf16, #tpu.memory_space<vmem>>, %arg6: memref<1x128xf32, #tpu.memory_space<vmem>>, %arg7: memref<256x128xf32, #tpu.memory_space<vmem>>) attributes {dimension_semantics = [#tpu.dimension_semantics<arbitrary>], iteration_bounds = array<i64: 1>, scalar_prefetch = 0 : i64, scratch_operands = 0 : i64, tpu.core_type = #tpu.core_type<tc>, window_params = [{pipeline_mode = #tpu.pipeline_mode<synchronous>, transform_indices = @transform_0, window_bounds = array<i64: 256, 256>}, {pipeline_mode = #tpu.pipeline_mode<synchronous>, transform_indices = @transform_1, window_bounds = array<i64: 256, 128>}, {pipeline_mode = #tpu.pipeline_mode<synchronous>, transform_indices = @transform_2, window_bounds = array<i64: 128, 128>}, {pipeline_mode = #tpu.pipeline_mode<synchronous>, transform_indices = @transform_3, window_bounds = array<i64: 1, 128>}, {pipeline_mode = #tpu.pipeline_mode<synchronous>, transform_indices = @transform_4, window_bounds = array<i64: 128, 128>}, {pipeline_mode = #tpu.pipeline_mode<synchronous>, transform_indices = @transform_5, window_bounds = array<i64: 1, 128>}, {pipeline_mode = #tpu.pipeline_mode<synchronous>, transform_indices = @transform_6, window_bounds = array<i64: 256, 128>}]} {
    %c0 = arith.constant 0 : index
    %c0_0 = arith.constant 0 : index
    %0 = vector.load %arg2[%c0, %c0_0] : memref<256x128xbf16, #tpu.memory_space<vmem>>, vector<256x128xbf16>
    %c0_1 = arith.constant 0 : index
    %c0_2 = arith.constant 0 : index
    %1 = vector.load %arg3[%c0_1, %c0_2] : memref<128x128xbf16, #tpu.memory_space<vmem>>, vector<128x128xbf16>
    %cst = arith.constant dense<0.000000e+00> : vector<256x128xf32>
    %2 = tpu.matmul %0, %1, %cst {dimension_numbers = #tpu.dot_dimension_numbers<[1], [0], [0], [1], [0, 0, 1, 1], [], []>} : vector<256x128xbf16>, vector<128x128xbf16>, vector<256x128xf32> -> vector<256x128xf32>
    %c0_3 = arith.constant 0 : index
    %c0_4 = arith.constant 0 : index
    %3 = vector.load %arg1[%c0_3, %c0_4] : memref<256x256xbf16, #tpu.memory_space<vmem>>, vector<256x256xbf16>
    %4 = arith.truncf %2 : vector<256x128xf32> to vector<256x128xbf16>
    %cst_5 = arith.constant dense<0.000000e+00> : vector<256x128xf32>
    %5 = tpu.matmul %3, %4, %cst_5 {dimension_numbers = #tpu.dot_dimension_numbers<[1], [0], [0], [1], [0, 0, 1, 1], [], []>} : vector<256x256xbf16>, vector<256x128xbf16>, vector<256x128xf32> -> vector<256x128xf32>
    %c0_6 = arith.constant 0 : index
    %c0_7 = arith.constant 0 : index
    %6 = vector.load %arg4[%c0_6, %c0_7] : memref<1x128xf32, #tpu.memory_space<vmem>>, vector<1x128xf32>
    %7 = vector.broadcast %6 : vector<1x128xf32> to vector<256x128xf32>
    %8 = arith.addf %5, %7 : vector<256x128xf32>
    %cst_8 = arith.constant 0.000000e+00 : f32
    %9 = vector.broadcast %cst_8 : f32 to vector<256x128xf32>
    %10 = arith.maximumf %8, %9 : vector<256x128xf32>
    %11 = arith.truncf %10 : vector<256x128xf32> to vector<256x128xbf16>
    %c0_9 = arith.constant 0 : index
    %c0_10 = arith.constant 0 : index
    %12 = vector.load %arg5[%c0_9, %c0_10] : memref<128x128xbf16, #tpu.memory_space<vmem>>, vector<128x128xbf16>
    %cst_11 = arith.constant dense<0.000000e+00> : vector<256x128xf32>
    %13 = tpu.matmul %11, %12, %cst_11 {dimension_numbers = #tpu.dot_dimension_numbers<[1], [0], [0], [1], [0, 0, 1, 1], [], []>} : vector<256x128xbf16>, vector<128x128xbf16>, vector<256x128xf32> -> vector<256x128xf32>
    %c0_12 = arith.constant 0 : index
    %c0_13 = arith.constant 0 : index
    %14 = vector.load %arg1[%c0_12, %c0_13] : memref<256x256xbf16, #tpu.memory_space<vmem>>, vector<256x256xbf16>
    %15 = arith.truncf %13 : vector<256x128xf32> to vector<256x128xbf16>
    %cst_14 = arith.constant dense<0.000000e+00> : vector<256x128xf32>
    %16 = tpu.matmul %14, %15, %cst_14 {dimension_numbers = #tpu.dot_dimension_numbers<[1], [0], [0], [1], [0, 0, 1, 1], [], []>} : vector<256x256xbf16>, vector<256x128xbf16>, vector<256x128xf32> -> vector<256x128xf32>
    %c0_15 = arith.constant 0 : index
    %c0_16 = arith.constant 0 : index
    %17 = vector.load %arg6[%c0_15, %c0_16] : memref<1x128xf32, #tpu.memory_space<vmem>>, vector<1x128xf32>
    %18 = vector.broadcast %17 : vector<1x128xf32> to vector<256x128xf32>
    %19 = arith.addf %16, %18 : vector<256x128xf32>
    %20 = tpu.iota {dimensions = array<i32: 1>} : vector<256x128xi32>
    %c7_i32 = arith.constant 7 : i32
    %21 = vector.broadcast %c7_i32 : i32 to vector<256x128xi32>
    %22 = arith.cmpi slt, %20, %21 : vector<256x128xi32>
    %cst_17 = arith.constant -1.000000e+30 : f32
    %23 = vector.broadcast %cst_17 : f32 to vector<256x128xf32>
    %24 = arith.select %22, %19, %23 : vector<256x128xi1>, vector<256x128xf32>
    %cst_18 = arith.constant dense<0xFF800000> : vector<256xf32>
    %25 = vector.multi_reduction <maximumf>, %24, %cst_18 [1] : vector<256x128xf32> to vector<256xf32>
    %26 = vector.shape_cast %25 : vector<256xf32> to vector<256x1xf32>
    %27 = vector.broadcast %26 : vector<256x1xf32> to vector<256x128xf32>
    %28 = arith.subf %24, %27 : vector<256x128xf32>
    %29 = math.exp %28 : vector<256x128xf32>
    %cst_19 = arith.constant 0.000000e+00 : f32
    %30 = vector.broadcast %cst_19 : f32 to vector<256x128xf32>
    %31 = arith.select %22, %29, %30 : vector<256x128xi1>, vector<256x128xf32>
    %cst_20 = arith.constant dense<0.000000e+00> : vector<256xf32>
    %32 = vector.multi_reduction <add>, %31, %cst_20 [1] : vector<256x128xf32> to vector<256xf32>
    %33 = vector.shape_cast %32 : vector<256xf32> to vector<256x1xf32>
    %34 = math.log %33 : vector<256x1xf32>
    %35 = vector.broadcast %34 : vector<256x1xf32> to vector<256x128xf32>
    %36 = arith.subf %28, %35 : vector<256x128xf32>
    %cst_21 = arith.constant 0.000000e+00 : f32
    %37 = vector.broadcast %cst_21 : f32 to vector<256x128xf32>
    %38 = arith.select %22, %36, %37 : vector<256x128xi1>, vector<256x128xf32>
    %c0_22 = arith.constant 0 : index
    %c0_23 = arith.constant 0 : index
    %39 = vector.load %arg7[%c0_22, %c0_23] : memref<256x128xf32, #tpu.memory_space<vmem>>, vector<256x128xf32>
    tpu.vector_store %arg7[%c0_22, %c0_23], %38 {strides = array<i32>} : memref<256x128xf32, #tpu.memory_space<vmem>>, vector<256x128xf32>,
    return
  }
  func.func @transform_0(%arg0: i32) -> (i32, i32) {
    %c0_i32 = arith.constant 0 : i32
    %c0_i32_0 = arith.constant 0 : i32
    %c0_i32_1 = arith.constant 0 : i32
    return %c0_i32, %c0_i32_0 : i32, i32
  }
  func.func @transform_1(%arg0: i32) -> (i32, i32) {
    %c0_i32 = arith.constant 0 : i32
    %c0_i32_0 = arith.constant 0 : i32
    %c0_i32_1 = arith.constant 0 : i32
    return %c0_i32, %c0_i32_0 : i32, i32
  }
  func.func @transform_2(%arg0: i32) -> (i32, i32) {
    %c0_i32 = arith.constant 0 : i32
    %c0_i32_0 = arith.constant 0 : i32
    %c0_i32_1 = arith.constant 0 : i32
    return %c0_i32, %c0_i32_0 : i32, i32
  }
  func.func @transform_3(%arg0: i32) -> (i32, i32) {
    %c0_i32 = arith.constant 0 : i32
    %c0_i32_0 = arith.constant 0 : i32
    %c0_i32_1 = arith.constant 0 : i32
    return %c0_i32, %c0_i32_0 : i32, i32
  }
  func.func @transform_4(%arg0: i32) -> (i32, i32) {
    %c0_i32 = arith.constant 0 : i32
    %c0_i32_0 = arith.constant 0 : i32
    %c0_i32_1 = arith.constant 0 : i32
    return %c0_i32, %c0_i32_0 : i32, i32
  }
  func.func @transform_5(%arg0: i32) -> (i32, i32) {
    %c0_i32 = arith.constant 0 : i32
    %c0_i32_0 = arith.constant 0 : i32
    %c0_i32_1 = arith.constant 0 : i32
    return %c0_i32, %c0_i32_0 : i32, i32
  }
  func.func @transform_6(%arg0: i32) -> (i32, i32) {
    %c0_i32 = arith.constant 0 : i32
    %c0_i32_0 = arith.constant 0 : i32
    %c0_i32_1 = arith.constant 0 : i32
    return %c0_i32, %c0_i32_0 : i32, i32
  }
}

</mosaic_0001>

<llo_original>
// kernel: gcn_forward.1
$region0: #{gcn_forward.1}
  #allocation0 [shape = 'u32[]', space=smem, size = 0x4, offset = 0x4, fixed_abs, tag = 'smem constant byte address 0x4 - core index']
  #allocation1 [shape = 'u32[144,128]{1,0:T(1,128)}', space=vmem, size = 0x12000, scoped, tag = 'internal scratch']
  %s0 = inlined_call_operand.vmem [shape: bf16[256,256], index: 0, kind: input, shape index: {}]
  %s1 = inlined_call_operand.vmem [shape: bf16[256,128], index: 1, kind: input, shape index: {}]
  %s2 = inlined_call_operand.vmem [shape: bf16[128,128], index: 2, kind: input, shape index: {}]
  %s3 = inlined_call_operand.vmem [shape: f32[1,128], index: 3, kind: input, shape index: {}]
  %s4 = inlined_call_operand.vmem [shape: bf16[128,128], index: 4, kind: input, shape index: {}]
  %s5 = inlined_call_operand.vmem [shape: f32[1,128], index: 5, kind: input, shape index: {}]
  %s6 = inlined_call_operand.vmem [shape: f32[256,128], index: 6, kind: output, shape index: {}]
  %s7 = sld [smem:[#allocation0]]
  $region34: #{gcn_forward.1} parent=0
    _
  %s9 = ssub.s32 1, %s7
  %s10 = scalar_select 0, %s9, %s7
  // Predicated region
  $region2: #{gcn_forward.1} parent=0 // pred_check
    _
  $region3: #{gcn_forward.1} parent=0 // pred_check_branch
    %12 = sbr.rel (0) target = $region5
  $region4: #{gcn_forward.1} parent=0 // pred_region
    _
  $region5: #{gcn_forward.1} parent=0 // pred_fallthru
    _
  // Predicated region
  $region6: #{gcn_forward.1} parent=0 // pred_check
    _
  $region7: #{gcn_forward.1} parent=0 // pred_check_branch
    %14 = sbr.rel (0) target = $region9
  $region8: #{gcn_forward.1} parent=0 // pred_region
    _
  $region9: #{gcn_forward.1} parent=0 // pred_fallthru
    _
  // Predicated region
  $region10: #{gcn_forward.1} parent=0 // pred_check
    _
  $region11: #{gcn_forward.1} parent=0 // pred_check_branch
    %16 = sbr.rel (0) target = $region13
  $region12: #{gcn_forward.1} parent=0 // pred_region
    _
  $region13: #{gcn_forward.1} parent=0 // pred_fallthru
    _
  // Predicated region
  $region14: #{gcn_forward.1} parent=0 // pred_check
    _
  $region15: #{gcn_forward.1} parent=0 // pred_check_branch
    %18 = sbr.rel (0) target = $region17
  $region16: #{gcn_forward.1} parent=0 // pred_region
    _
  $region17: #{gcn_forward.1} parent=0 // pred_fallthru
    _
  // Predicated region
  $region18: #{gcn_forward.1} parent=0 // pred_check
    _
  $region19: #{gcn_forward.1} parent=0 // pred_check_branch
    %20 = sbr.rel (0) target = $region21
  $region20: #{gcn_forward.1} parent=0 // pred_region
    _
  $region21: #{gcn_forward.1} parent=0 // pred_fallthru
    _
  // Predicated region
  $region22: #{gcn_forward.1} parent=0 // pred_check
    _
  $region23: #{gcn_forward.1} parent=0 // pred_check_branch
    %22 = sbr.rel (0) target = $region25
  $region24: #{gcn_forward.1} parent=0 // pred_region
    _
  $region25: #{gcn_forward.1} parent=0 // pred_fallthru
    _
  %v24 = vld [vmem:[%s1] sm:$0xf]
  %v25 = vld [vmem:[%s1 + $0x4] sm:$0xf]
  %v26 = vld [vmem:[%s1 + $0x8] sm:$0xf]
  %v27 = vld [vmem:[%s1 + $0xc] sm:$0xf]
  %v28 = vld [vmem:[%s1 + $0x10] sm:$0xf]
  %v29 = vld [vmem:[%s1 + $0x14] sm:$0xf]
  %v30 = vld [vmem:[%s1 + $0x18] sm:$0xf]
  %v31 = vld [vmem:[%s1 + $0x1c] sm:$0xf]
  %v32 = vld [vmem:[%s1 + $0x20] sm:$0xf]
  %v33 = vld [vmem:[%s1 + $0x24] sm:$0xf]
  %v34 = vld [vmem:[%s1 + $0x28] sm:$0xf]
  %v35 = vld [vmem:[%s1 + $0x2c] sm:$0xf]
  %v36 = vld [vmem:[%s1 + $0x30] sm:$0xf]
  %v37 = vld [vmem:[%s1 + $0x34] sm:$0xf]
  %v38 = vld [vmem:[%s1 + $0x38] sm:$0xf]
  %v39 = vld [vmem:[%s1 + $0x3c] sm:$0xf]
  %v40 = vld [vmem:[%s1 + $0x40] sm:$0xf]
  %v41 = vld [vmem:[%s1 + $0x44] sm:$0xf]
  %v42 = vld [vmem:[%s1 + $0x48] sm:$0xf]
  %v43 = vld [vmem:[%s1 + $0x4c] sm:$0xf]
  %v44 = vld [vmem:[%s1 + $0x50] sm:$0xf]
  %v45 = vld [vmem:[%s1 + $0x54] sm:$0xf]
  %v46 = vld [vmem:[%s1 + $0x58] sm:$0xf]
  %v47 = vld [vmem:[%s1 + $0x5c] sm:$0xf]
  %v48 = vld [vmem:[%s1 + $0x60] sm:$0xf]
  %v49 = vld [vmem:[%s1 + $0x64] sm:$0xf]
  %v50 = vld [vmem:[%s1 + $0x68] sm:$0xf]
  %v51 = vld [vmem:[%s1 + $0x6c] sm:$0xf]
  %v52 = vld [vmem:[%s1 + $0x70] sm:$0xf]
  %v53 = vld [vmem:[%s1 + $0x74] sm:$0xf]
  %v54 = vld [vmem:[%s1 + $0x78] sm:$0xf]
  %v55 = vld [vmem:[%s1 + $0x7c] sm:$0xf]
  %v56 = vld [vmem:[%s2] sm:$0xf]
  %v57 = vld [vmem:[%s2 + $0x4] sm:$0xf]
  %v58 = vld [vmem:[%s2 + $0x8] sm:$0xf]
  %v59 = vld [vmem:[%s2 + $0xc] sm:$0xf]
  %v60 = vld [vmem:[%s2 + $0x10] sm:$0xf]
  %v61 = vld [vmem:[%s2 + $0x14] sm:$0xf]
  %v62 = vld [vmem:[%s2 + $0x18] sm:$0xf]
  %v63 = vld [vmem:[%s2 + $0x1c] sm:$0xf]
  %v64 = vld [vmem:[%s2 + $0x20] sm:$0xf]
  %v65 = vld [vmem:[%s2 + $0x24] sm:$0xf]
  %v66 = vld [vmem:[%s2 + $0x28] sm:$0xf]
  %v67 = vld [vmem:[%s2 + $0x2c] sm:$0xf]
  %v68 = vld [vmem:[%s2 + $0x30] sm:$0xf]
  %v69 = vld [vmem:[%s2 + $0x34] sm:$0xf]
  %v70 = vld [vmem:[%s2 + $0x38] sm:$0xf]
  %v71 = vld [vmem:[%s2 + $0x3c] sm:$0xf]
  %v104 = vunpack.c.l.b16 %v24
  %v105 = vunpack.c.l.b16 %v25
  %v106 = vunpack.c.l.b16 %v26
  %v107 = vunpack.c.l.b16 %v27
  %v108 = vunpack.c.l.b16 %v28
  %v109 = vunpack.c.l.b16 %v29
  %v110 = vunpack.c.l.b16 %v30
  %v111 = vunpack.c.l.b16 %v31
  %v112 = vunpack.c.l.b16 %v32
  %v113 = vunpack.c.l.b16 %v33
  %v114 = vunpack.c.l.b16 %v34
  %v115 = vunpack.c.l.b16 %v35
  %v116 = vunpack.c.l.b16 %v36
  %v117 = vunpack.c.l.b16 %v37
  %v118 = vunpack.c.l.b16 %v38
  %v119 = vunpack.c.l.b16 %v39
  %v120 = vunpack.c.l.b16 %v40
  %v121 = vunpack.c.l.b16 %v41
  %v122 = vunpack.c.l.b16 %v42
  %v123 = vunpack.c.l.b16 %v43
  %v124 = vunpack.c.l.b16 %v44
  %v125 = vunpack.c.l.b16 %v45
  %v126 = vunpack.c.l.b16 %v46
  %v127 = vunpack.c.l.b16 %v47
  %v128 = vunpack.c.l.b16 %v48
  %v129 = vunpack.c.l.b16 %v49
  %v130 = vunpack.c.l.b16 %v50
  %v131 = vunpack.c.l.b16 %v51
  %v132 = vunpack.c.l.b16 %v52
  %v133 = vunpack.c.l.b16 %v53
  %v134 = vunpack.c.l.b16 %v54
  %v135 = vunpack.c.l.b16 %v55
  %v136 = vpack.c.b16 %v105, %v104
  %v137 = vpack.c.b16 %v107, %v106
  %v138 = vpack.c.b16 %v109, %v108
  %v139 = vpack.c.b16 %v111, %v110
  %v140 = vpack.c.b16 %v113, %v112
  %v141 = vpack.c.b16 %v115, %v114
  %v142 = vpack.c.b16 %v117, %v116
  %v143 = vpack.c.b16 %v119, %v118
  %v144 = vpack.c.b16 %v121, %v120
  %v145 = vpack.c.b16 %v123, %v122
  %v146 = vpack.c.b16 %v125, %v124
  %v147 = vpack.c.b16 %v127, %v126
  %v148 = vpack.c.b16 %v129, %v128
  %v149 = vpack.c.b16 %v131, %v130
  %v150 = vpack.c.b16 %v133, %v132
  %v151 = vpack.c.b16 %v135, %v134
  %v184 = vunpack.c.l.b16 %v56
  %v185 = vunpack.c.l.b16 %v57
  %v186 = vunpack.c.l.b16 %v58
  %v187 = vunpack.c.l.b16 %v59
  %v188 = vunpack.c.l.b16 %v60
  %v189 = vunpack.c.l.b16 %v61
  %v190 = vunpack.c.l.b16 %v62
  %v191 = vunpack.c.l.b16 %v63
  %v192 = vunpack.c.l.b16 %v64
  %v193 = vunpack.c.l.b16 %v65
  %v194 = vunpack.c.l.b16 %v66
  %v195 = vunpack.c.l.b16 %v67
  %v196 = vunpack.c.l.b16 %v68
  %v197 = vunpack.c.l.b16 %v69
  %v198 = vunpack.c.l.b16 %v70
  %v199 = vunpack.c.l.b16 %v71
  %v200 = vpack.c.b16 %v185, %v184
  %v201 = vpack.c.b16 %v187, %v186
  %v202 = vpack.c.b16 %v189, %v188
  %v203 = vpack.c.b16 %v191, %v190
  %v204 = vpack.c.b16 %v193, %v192
  %v205 = vpack.c.b16 %v195, %v194
  %v206 = vpack.c.b16 %v197, %v196
  %v207 = vpack.c.b16 %v199, %v198
  %216 = vmatprep.subr.bf16.mxu0 0
  %217 = vmatpush1.bf16.msra.mxu0 %v207
  %218 = vmatprep.subr.bf16.mxu0 0
  %219 = vmatpush1.bf16.msra.mxu0 %v206
  %220 = vmatprep.subr.bf16.mxu0 0
  %221 = vmatpush1.bf16.msra.mxu0 %v205
  %222 = vmatprep.subr.bf16.mxu0 0
  %223 = vmatpush1.bf16.msra.mxu0 %v204
  %224 = vmatprep.subr.bf16.mxu0 0
  %225 = vmatpush1.bf16.msra.mxu0 %v203
  %226 = vmatprep.subr.bf16.mxu0 0
  %227 = vmatpush1.bf16.msra.mxu0 %v202
  %228 = vmatprep.subr.bf16.mxu0 0
  %229 = vmatpush1.bf16.msra.mxu0 %v201
  %230 = vmatprep.subr.bf16.mxu0 0
  %231 = vmatpush1.bf16.msra.mxu0 %v200
  %232 = vmatprep.subr.bf16.mxu0 0
  %233 = vmatpush2.bf16.msra.mxu0 0
  %234 = vmatprep.subr.bf16.mxu0 0
  %235 = vmatpush2.bf16.msra.mxu0 0
  %236 = vmatprep.subr.bf16.mxu0 0
  %237 = vmatpush2.bf16.msra.mxu0 0
  %238 = vmatprep.subr.bf16.mxu0 0
  %239 = vmatpush2.bf16.msra.mxu0 0
  %240 = vmatprep.subr.bf16.mxu0 0
  %241 = vmatpush2.bf16.msra.mxu0 0
  %242 = vmatprep.subr.bf16.mxu0 0
  %243 = vmatpush2.bf16.msra.mxu0 0
  %244 = vmatprep.subr.bf16.mxu0 0
  %245 = vmatpush2.bf16.msra.mxu0 0
  %246 = vmatprep.subr.bf16.mxu0 0
  %247 = vmatpush2.bf16.msra.mxu0 0
  %248 = vmatprep.mubr.bf16.mxu0 0
  %249 = vmatmul.mubr.bf16.gmra.mxu0 %v136
  %v250 = vpop.f32.mrf.mxu0
  %v251 = vadd.f32 0.0, %v250
  %v252 = vpop.f32.mrf.mxu0
  %v253 = vpop.f32.mrf.mxu0
  %v254 = vadd.f32 0.0, %v253
  %v255 = vpop.f32.mrf.mxu0
  %256 = vmatprep.mubr.bf16.mxu0 0
  %257 = vmatmul.mubr.bf16.gmra.mxu0 %v137
  %v258 = vpop.f32.mrf.mxu0
  %v259 = vadd.f32 0.0, %v258
  %v260 = vpop.f32.mrf.mxu0
  %v261 = vpop.f32.mrf.mxu0
  %v262 = vadd.f32 0.0, %v261
  %v263 = vpop.f32.mrf.mxu0
  %264 = vmatprep.mubr.bf16.mxu0 0
  %265 = vmatmul.mubr.bf16.gmra.mxu0 %v138
  %v266 = vpop.f32.mrf.mxu0
  %v267 = vadd.f32 0.0, %v266
  %v268 = vpop.f32.mrf.mxu0
  %v269 = vpop.f32.mrf.mxu0
  %v270 = vadd.f32 0.0, %v269
  %v271 = vpop.f32.mrf.mxu0
  %272 = vmatprep.mubr.bf16.mxu0 0
  %273 = vmatmul.mubr.bf16.gmra.mxu0 %v139
  %v274 = vpop.f32.mrf.mxu0
  %v275 = vadd.f32 0.0, %v274
  %v276 = vpop.f32.mrf.mxu0
  %v277 = vpop.f32.mrf.mxu0
  %v278 = vadd.f32 0.0, %v277
  %v279 = vpop.f32.mrf.mxu0
  %280 = vmatprep.mubr.bf16.mxu0 0
  %281 = vmatmul.mubr.bf16.gmra.mxu0 %v140
  %v282 = vpop.f32.mrf.mxu0
  %v283 = vadd.f32 0.0, %v282
  %v284 = vpop.f32.mrf.mxu0
  %v285 = vpop.f32.mrf.mxu0
  %v286 = vadd.f32 0.0, %v285
  %v287 = vpop.f32.mrf.mxu0
  %288 = vmatprep.mubr.bf16.mxu0 0
  %289 = vmatmul.mubr.bf16.gmra.mxu0 %v141
  %v290 = vpop.f32.mrf.mxu0
  %v291 = vadd.f32 0.0, %v290
  %v292 = vpop.f32.mrf.mxu0
  %v293 = vpop.f32.mrf.mxu0
  %v294 = vadd.f32 0.0, %v293
  %v295 = vpop.f32.mrf.mxu0
  %296 = vmatprep.mubr.bf16.mxu0 0
  %297 = vmatmul.mubr.bf16.gmra.mxu0 %v142
  %v298 = vpop.f32.mrf.mxu0
  %v299 = vadd.f32 0.0, %v298
  %v300 = vpop.f32.mrf.mxu0
  %v301 = vpop.f32.mrf.mxu0
  %v302 = vadd.f32 0.0, %v301
  %v303 = vpop.f32.mrf.mxu0
  %304 = vmatprep.mubr.bf16.mxu0 0
  %305 = vmatmul.mubr.bf16.gmra.mxu0 %v143
  %v306 = vpop.f32.mrf.mxu0
  %v307 = vadd.f32 0.0, %v306
  %v308 = vpop.f32.mrf.mxu0
  %v309 = vpop.f32.mrf.mxu0
  %v310 = vadd.f32 0.0, %v309
  %v311 = vpop.f32.mrf.mxu0
  %312 = vmatprep.mubr.bf16.mxu0 0
  %313 = vmatmul.mubr.bf16.gmra.mxu0 %v144
  %v314 = vpop.f32.mrf.mxu0
  %v315 = vadd.f32 0.0, %v314
  %v316 = vpop.f32.mrf.mxu0
  %v317 = vpop.f32.mrf.mxu0
  %v318 = vadd.f32 0.0, %v317
  %v319 = vpop.f32.mrf.mxu0
  %320 = vmatprep.mubr.bf16.mxu0 0
  %321 = vmatmul.mubr.bf16.gmra.mxu0 %v145
  %v322 = vpop.f32.mrf.mxu0
  %v323 = vadd.f32 0.0, %v322
  %v324 = vpop.f32.mrf.mxu0
  %v325 = vpop.f32.mrf.mxu0
  %v326 = vadd.f32 0.0, %v325
  %v327 = vpop.f32.mrf.mxu0
  %328 = vmatprep.mubr.bf16.mxu0 0
  %329 = vmatmul.mubr.bf16.gmra.mxu0 %v146
  %v330 = vpop.f32.mrf.mxu0
  %v331 = vadd.f32 0.0, %v330
  %v332 = vpop.f32.mrf.mxu0
  %v333 = vpop.f32.mrf.mxu0
  %v334 = vadd.f32 0.0, %v333
  %v335 = vpop.f32.mrf.mxu0
  %336 = vmatprep.mubr.bf16.mxu0 0
  %337 = vmatmul.mubr.bf16.gmra.mxu0 %v147
  %v338 = vpop.f32.mrf.mxu0
  %v339 = vadd.f32 0.0, %v338
  %v340 = vpop.f32.mrf.mxu0
  %v341 = vpop.f32.mrf.mxu0
  %v342 = vadd.f32 0.0, %v341
  %v343 = vpop.f32.mrf.mxu0
  %344 = vmatprep.mubr.bf16.mxu0 0
  %345 = vmatmul.mubr.bf16.gmra.mxu0 %v148
  %v346 = vpop.f32.mrf.mxu0
  %v347 = vadd.f32 0.0, %v346
  %v348 = vpop.f32.mrf.mxu0
  %v349 = vpop.f32.mrf.mxu0
  %v350 = vadd.f32 0.0, %v349
  %v351 = vpop.f32.mrf.mxu0
  %352 = vmatprep.mubr.bf16.mxu0 0
  %353 = vmatmul.mubr.bf16.gmra.mxu0 %v149
  %v354 = vpop.f32.mrf.mxu0
  %v355 = vadd.f32 0.0, %v354
  %v356 = vpop.f32.mrf.mxu0
  %v357 = vpop.f32.mrf.mxu0
  %v358 = vadd.f32 0.0, %v357
  %v359 = vpop.f32.mrf.mxu0
  %360 = vmatprep.mubr.bf16.mxu0 0
  %361 = vmatmul.mubr.bf16.gmra.mxu0 %v150
  %v362 = vpop.f32.mrf.mxu0
  %v363 = vadd.f32 0.0, %v362
  %v364 = vpop.f32.mrf.mxu0
  %v365 = vpop.f32.mrf.mxu0
  %v366 = vadd.f32 0.0, %v365
  %v367 = vpop.f32.mrf.mxu0
  %368 = vmatprep.mubr.bf16.mxu0 0
  %369 = vmatmul.mubr.bf16.gmra.mxu0 %v151
  %v370 = vpop.f32.mrf.mxu0
  %v371 = vadd.f32 0.0, %v370
  %v372 = vpop.f32.mrf.mxu0
  %v373 = vpop.f32.mrf.mxu0
  %v374 = vadd.f32 0.0, %v373
  %v375 = vpop.f32.mrf.mxu0
  %376 = vdwg.mxu0
  %v377 = vld [vmem:[%s0] sm:$0xff]
  %v378 = vld [vmem:[%s0 + $0x8] sm:$0xff]
  %v379 = vld [vmem:[%s0 + $0x10] sm:$0xff]
  %v380 = vld [vmem:[%s0 + $0x18] sm:$0xff]
  %v381 = vld [vmem:[%s0 + $0x20] sm:$0xff]
  %v382 = vld [vmem:[%s0 + $0x28] sm:$0xff]
  %v383 = vld [vmem:[%s0 + $0x30] sm:$0xff]
  %v384 = vld [vmem:[%s0 + $0x38] sm:$0xff]
  %v385 = vld [vmem:[%s0 + $0x40] sm:$0xff]
  %v386 = vld [vmem:[%s0 + $0x48] sm:$0xff]
  %v387 = vld [vmem:[%s0 + $0x50] sm:$0xff]
  %v388 = vld [vmem:[%s0 + $0x58] sm:$0xff]
  %v389 = vld [vmem:[%s0 + $0x60] sm:$0xff]
  %v390 = vld [vmem:[%s0 + $0x68] sm:$0xff]
  %v391 = vld [vmem:[%s0 + $0x70] sm:$0xff]
  %v392 = vld [vmem:[%s0 + $0x78] sm:$0xff]
  %v393 = vld [vmem:[%s0 + $0x80] sm:$0xff]
  %v394 = vld [vmem:[%s0 + $0x88] sm:$0xff]
  %v395 = vld [vmem:[%s0 + $0x90] sm:$0xff]
  %v396 = vld [vmem:[%s0 + $0x98] sm:$0xff]
  %v397 = vld [vmem:[%s0 + $0xa0] sm:$0xff]
  %v398 = vld [vmem:[%s0 + $0xa8] sm:$0xff]
  %v399 = vld [vmem:[%s0 + $0xb0] sm:$0xff]
  %v400 = vld [vmem:[%s0 + $0xb8] sm:$0xff]
  %v401 = vld [vmem:[%s0 + $0xc0] sm:$0xff]
  %v402 = vld [vmem:[%s0 + $0xc8] sm:$0xff]
  %v403 = vld [vmem:[%s0 + $0xd0] sm:$0xff]
  %v404 = vld [vmem:[%s0 + $0xd8] sm:$0xff]
  %v405 = vld [vmem:[%s0 + $0xe0] sm:$0xff]
  %v406 = vld [vmem:[%s0 + $0xe8] sm:$0xff]
  %v407 = vld [vmem:[%s0 + $0xf0] sm:$0xff]
  %v408 = vld [vmem:[%s0 + $0xf8] sm:$0xff]
  %v409 = vpack.c.bf16 %v254, %v251
  %v410 = vpack.c.bf16 %v262, %v259
  %v411 = vpack.c.bf16 %v270, %v267
  %v412 = vpack.c.bf16 %v278, %v275
  %v413 = vpack.c.bf16 %v286, %v283
  %v414 = vpack.c.bf16 %v294, %v291
  %v415 = vpack.c.bf16 %v302, %v299
  %v416 = vpack.c.bf16 %v310, %v307
  %v417 = vpack.c.bf16 %v318, %v315
  %v418 = vpack.c.bf16 %v326, %v323
  %v419 = vpack.c.bf16 %v334, %v331
  %v420 = vpack.c.bf16 %v342, %v339
  %v421 = vpack.c.bf16 %v350, %v347
  %v422 = vpack.c.bf16 %v358, %v355
  %v423 = vpack.c.bf16 %v366, %v363
  %v424 = vpack.c.bf16 %v374, %v371
  %v425 = vld [vmem:[%s3] sm:$0x1]
  %v427 = vlaneseq
  %v428 = vshrl.u32 %v427, 7
  %v429 = vsub.s32 0, %v428
  %v430 = vrot.slane %v425, %v429
  %v464 = vunpack.c.l.b16 %v377
  %v465 = vunpack.c.h.b16 %v377
  %v466 = vunpack.c.l.b16 %v378
  %v467 = vunpack.c.h.b16 %v378
  %v468 = vunpack.c.l.b16 %v379
  %v469 = vunpack.c.h.b16 %v379
  %v470 = vunpack.c.l.b16 %v380
  %v471 = vunpack.c.h.b16 %v380
  %v472 = vunpack.c.l.b16 %v381
  %v473 = vunpack.c.h.b16 %v381
  %v474 = vunpack.c.l.b16 %v382
  %v475 = vunpack.c.h.b16 %v382
  %v476 = vunpack.c.l.b16 %v383
  %v477 = vunpack.c.h.b16 %v383
  %v478 = vunpack.c.l.b16 %v384
  %v479 = vunpack.c.h.b16 %v384
  %v480 = vunpack.c.l.b16 %v385
  %v481 = vunpack.c.h.b16 %v385
  %v482 = vunpack.c.l.b16 %v386
  %v483 = vunpack.c.h.b16 %v386
  %v484 = vunpack.c.l.b16 %v387
  %v485 = vunpack.c.h.b16 %v387
  %v486 = vunpack.c.l.b16 %v388
  %v487 = vunpack.c.h.b16 %v388
  %v488 = vunpack.c.l.b16 %v389
  %v489 = vunpack.c.h.b16 %v389
  %v490 = vunpack.c.l.b16 %v390
  %v491 = vunpack.c.h.b16 %v390
  %v492 = vunpack.c.l.b16 %v391
  %v493 = vunpack.c.h.b16 %v391
  %v494 = vunpack.c.l.b16 %v392
  %v495 = vunpack.c.h.b16 %v392
  %v496 = vunpack.c.l.b16 %v393
  %v497 = vunpack.c.h.b16 %v393
  %v498 = vunpack.c.l.b16 %v394
  %v499 = vunpack.c.h.b16 %v394
  %v500 = vunpack.c.l.b16 %v395
  %v501 = vunpack.c.h.b16 %v395
  %v502 = vunpack.c.l.b16 %v396
  %v503 = vunpack.c.h.b16 %v396
  %v504 = vunpack.c.l.b16 %v397
  %v505 = vunpack.c.h.b16 %v397
  %v506 = vunpack.c.l.b16 %v398
  %v507 = vunpack.c.h.b16 %v398
  %v508 = vunpack.c.l.b16 %v399
  %v509 = vunpack.c.h.b16 %v399
  %v510 = vunpack.c.l.b16 %v400
  %v511 = vunpack.c.h.b16 %v400
  %v512 = vunpack.c.l.b16 %v401
  %v513 = vunpack.c.h.b16 %v401
  %v514 = vunpack.c.l.b16 %v402
  %v515 = vunpack.c.h.b16 %v402
  %v516 = vunpack.c.l.b16 %v403
  %v517 = vunpack.c.h.b16 %v403
  %v518 = vunpack.c.l.b16 %v404
  %v519 = vunpack.c.h.b16 %v404
  %v520 = vunpack.c.l.b16 %v405
  %v521 = vunpack.c.h.b16 %v405
  %v522 = vunpack.c.l.b16 %v406
  %v523 = vunpack.c.h.b16 %v406
  %v524 = vunpack.c.l.b16 %v407
  %v525 = vunpack.c.h.b16 %v407
  %v526 = vunpack.c.l.b16 %v408
  %v527 = vunpack.c.h.b16 %v408
  %v528 = vpack.c.b16 %v466, %v464
  %v529 = vpack.c.b16 %v467, %v465
  %v530 = vpack.c.b16 %v470, %v468
  %v531 = vpack.c.b16 %v471, %v469
  %v532 = vpack.c.b16 %v474, %v472
  %v533 = vpack.c.b16 %v475, %v473
  %v534 = vpack.c.b16 %v478, %v476
  %v535 = vpack.c.b16 %v479, %v477
  %v536 = vpack.c.b16 %v482, %v480
  %v537 = vpack.c.b16 %v483, %v481
  %v538 = vpack.c.b16 %v486, %v484
  %v539 = vpack.c.b16 %v487, %v485
  %v540 = vpack.c.b16 %v490, %v488
  %v541 = vpack.c.b16 %v491, %v489
  %v542 = vpack.c.b16 %v494, %v492
  %v543 = vpack.c.b16 %v495, %v493
  %v544 = vpack.c.b16 %v498, %v496
  %v545 = vpack.c.b16 %v499, %v497
  %v546 = vpack.c.b16 %v502, %v500
  %v547 = vpack.c.b16 %v503, %v501
  %v548 = vpack.c.b16 %v506, %v504
  %v549 = vpack.c.b16 %v507, %v505
  %v550 = vpack.c.b16 %v510, %v508
  %v551 = vpack.c.b16 %v511, %v509
  %v552 = vpack.c.b16 %v514, %v512
  %v553 = vpack.c.b16 %v515, %v513
  %v554 = vpack.c.b16 %v518, %v516
  %v555 = vpack.c.b16 %v519, %v517
  %v556 = vpack.c.b16 %v522, %v520
  %v557 = vpack.c.b16 %v523, %v521
  %v558 = vpack.c.b16 %v526, %v524
  %v559 = vpack.c.b16 %v527, %v525
  %592 = vmatprep.subr.bf16.mxu0 0
  %593 = vmatpush1.bf16.msra.mxu0 %v416
  %594 = vmatprep.subr.bf16.mxu0 0
  %595 = vmatpush1.bf16.msra.mxu0 %v415
  %596 = vmatprep.subr.bf16.mxu0 0
  %597 = vmatpush1.bf16.msra.mxu0 %v414
  %598 = vmatprep.subr.bf16.mxu0 0
  %599 = vmatpush1.bf16.msra.mxu0 %v413
  %600 = vmatprep.subr.bf16.mxu0 0
  %601 = vmatpush1.bf16.msra.mxu0 %v412
  %602 = vmatprep.subr.bf16.mxu0 0
  %603 = vmatpush1.bf16.msra.mxu0 %v411
  %604 = vmatprep.subr.bf16.mxu0 0
  %605 = vmatpush1.bf16.msra.mxu0 %v410
  %606 = vmatprep.subr.bf16.mxu0 0
  %607 = vmatpush1.bf16.msra.mxu0 %v409
  %608 = vmatprep.subr.bf16.mxu0 0
  %609 = vmatpush2.bf16.msra.mxu0 %v424
  %610 = vmatprep.subr.bf16.mxu0 0
  %611 = vmatpush2.bf16.msra.mxu0 %v423
  %612 = vmatprep.subr.bf16.mxu0 0
  %613 = vmatpush2.bf16.msra.mxu0 %v422
  %614 = vmatprep.subr.bf16.mxu0 0
  %615 = vmatpush2.bf16.msra.mxu0 %v421
  %616 = vmatprep.subr.bf16.mxu0 0
  %617 = vmatpush2.bf16.msra.mxu0 %v420
  %618 = vmatprep.subr.bf16.mxu0 0
  %619 = vmatpush2.bf16.msra.mxu0 %v419
  %620 = vmatprep.subr.bf16.mxu0 0
  %621 = vmatpush2.bf16.msra.mxu0 %v418
  %622 = vmatprep.subr.bf16.mxu0 0
  %623 = vmatpush2.bf16.msra.mxu0 %v417
  %624 = vmatprep.mubr.bf16.mxu0 %v529
  %625 = vmatmul.mubr.bf16.gmra.mxu0 %v528
  %v626 = vpop.f32.mrf.mxu0
  %v627 = vadd.f32 %v430, %v626
  %v628 = vpop.f32.mrf.mxu0
  %v629 = vpop.f32.mrf.mxu0
  %v630 = vadd.f32 %v430, %v629
  %v631 = vpop.f32.mrf.mxu0
  %632 = vmatprep.mubr.bf16.mxu0 %v531
  %633 = vmatmul.mubr.bf16.gmra.mxu0 %v530
  %v634 = vpop.f32.mrf.mxu0
  %v635 = vadd.f32 %v430, %v634
  %v636 = vpop.f32.mrf.mxu0
  %v637 = vpop.f32.mrf.mxu0
  %v638 = vadd.f32 %v430, %v637
  %v639 = vpop.f32.mrf.mxu0
  %640 = vmatprep.mubr.bf16.mxu0 %v533
  %641 = vmatmul.mubr.bf16.gmra.mxu0 %v532
  %v642 = vpop.f32.mrf.mxu0
  %v643 = vadd.f32 %v430, %v642
  %v644 = vpop.f32.mrf.mxu0
  %v645 = vpop.f32.mrf.mxu0
  %v646 = vadd.f32 %v430, %v645
  %v647 = vpop.f32.mrf.mxu0
  %648 = vmatprep.mubr.bf16.mxu0 %v535
  %649 = vmatmul.mubr.bf16.gmra.mxu0 %v534
  %v650 = vpop.f32.mrf.mxu0
  %v651 = vadd.f32 %v430, %v650
  %v652 = vpop.f32.mrf.mxu0
  %v653 = vpop.f32.mrf.mxu0
  %v654 = vadd.f32 %v430, %v653
  %v655 = vpop.f32.mrf.mxu0
  %656 = vmatprep.mubr.bf16.mxu0 %v537
  %657 = vmatmul.mubr.bf16.gmra.mxu0 %v536
  %v658 = vpop.f32.mrf.mxu0
  %v659 = vadd.f32 %v430, %v658
  %v660 = vpop.f32.mrf.mxu0
  %v661 = vpop.f32.mrf.mxu0
  %v662 = vadd.f32 %v430, %v661
  %v663 = vpop.f32.mrf.mxu0
  %664 = vmatprep.mubr.bf16.mxu0 %v539
  %665 = vmatmul.mubr.bf16.gmra.mxu0 %v538
  %v666 = vpop.f32.mrf.mxu0
  %v667 = vadd.f32 %v430, %v666
  %v668 = vpop.f32.mrf.mxu0
  %v669 = vpop.f32.mrf.mxu0
  %v670 = vadd.f32 %v430, %v669
  %v671 = vpop.f32.mrf.mxu0
  %672 = vmatprep.mubr.bf16.mxu0 %v541
  %673 = vmatmul.mubr.bf16.gmra.mxu0 %v540
  %v674 = vpop.f32.mrf.mxu0
  %v675 = vadd.f32 %v430, %v674
  %v676 = vpop.f32.mrf.mxu0
  %v677 = vpop.f32.mrf.mxu0
  %v678 = vadd.f32 %v430, %v677
  %v679 = vpop.f32.mrf.mxu0
  %680 = vmatprep.mubr.bf16.mxu0 %v543
  %681 = vmatmul.mubr.bf16.gmra.mxu0 %v542
  %v682 = vpop.f32.mrf.mxu0
  %v683 = vadd.f32 %v430, %v682
  %v684 = vpop.f32.mrf.mxu0
  %v685 = vpop.f32.mrf.mxu0
  %v686 = vadd.f32 %v430, %v685
  %v687 = vpop.f32.mrf.mxu0
  %688 = vmatprep.mubr.bf16.mxu0 %v545
  %689 = vmatmul.mubr.bf16.gmra.mxu0 %v544
  %v690 = vpop.f32.mrf.mxu0
  %v691 = vadd.f32 %v430, %v690
  %v692 = vpop.f32.mrf.mxu0
  %v693 = vpop.f32.mrf.mxu0
  %v694 = vadd.f32 %v430, %v693
  %v695 = vpop.f32.mrf.mxu0
  %696 = vmatprep.mubr.bf16.mxu0 %v547
  %697 = vmatmul.mubr.bf16.gmra.mxu0 %v546
  %v698 = vpop.f32.mrf.mxu0
  %v699 = vadd.f32 %v430, %v698
  %v700 = vpop.f32.mrf.mxu0
  %v701 = vpop.f32.mrf.mxu0
  %v702 = vadd.f32 %v430, %v701
  %v703 = vpop.f32.mrf.mxu0
  %704 = vmatprep.mubr.bf16.mxu0 %v549
  %705 = vmatmul.mubr.bf16.gmra.mxu0 %v548
  %v706 = vpop.f32.mrf.mxu0
  %v707 = vadd.f32 %v430, %v706
  %v708 = vpop.f32.mrf.mxu0
  %v709 = vpop.f32.mrf.mxu0
  %v710 = vadd.f32 %v430, %v709
  %v711 = vpop.f32.mrf.mxu0
  %712 = vmatprep.mubr.bf16.mxu0 %v551
  %713 = vmatmul.mubr.bf16.gmra.mxu0 %v550
  %v714 = vpop.f32.mrf.mxu0
  %v715 = vadd.f32 %v430, %v714
  %v716 = vpop.f32.mrf.mxu0
  %v717 = vpop.f32.mrf.mxu0
  %v718 = vadd.f32 %v430, %v717
  %v719 = vpop.f32.mrf.mxu0
  %720 = vmatprep.mubr.bf16.mxu0 %v553
  %721 = vmatmul.mubr.bf16.gmra.mxu0 %v552
  %v722 = vpop.f32.mrf.mxu0
  %v723 = vadd.f32 %v430, %v722
  %v724 = vpop.f32.mrf.mxu0
  %v725 = vpop.f32.mrf.mxu0
  %v726 = vadd.f32 %v430, %v725
  %v727 = vpop.f32.mrf.mxu0
  %728 = vmatprep.mubr.bf16.mxu0 %v555
  %729 = vmatmul.mubr.bf16.gmra.mxu0 %v554
  %v730 = vpop.f32.mrf.mxu0
  %v731 = vadd.f32 %v430, %v730
  %v732 = vpop.f32.mrf.mxu0
  %v733 = vpop.f32.mrf.mxu0
  %v734 = vadd.f32 %v430, %v733
  %v735 = vpop.f32.mrf.mxu0
  %736 = vmatprep.mubr.bf16.mxu0 %v557
  %737 = vmatmul.mubr.bf16.gmra.mxu0 %v556
  %v738 = vpop.f32.mrf.mxu0
  %v739 = vadd.f32 %v430, %v738
  %v740 = vpop.f32.mrf.mxu0
  %v741 = vpop.f32.mrf.mxu0
  %v742 = vadd.f32 %v430, %v741
  %v743 = vpop.f32.mrf.mxu0
  %744 = vmatprep.mubr.bf16.mxu0 %v559
  %745 = vmatmul.mubr.bf16.gmra.mxu0 %v558
  %v746 = vpop.f32.mrf.mxu0
  %v747 = vadd.f32 %v430, %v746
  %v748 = vpop.f32.mrf.mxu0
  %v749 = vpop.f32.mrf.mxu0
  %v750 = vadd.f32 %v430, %v749
  %v751 = vpop.f32.mrf.mxu0
  %752 = vdwg.mxu0
  %v753 = vmax.f32 %v627, 0.0
  %v754 = vmax.f32 %v630, 0.0
  %v755 = vmax.f32 %v635, 0.0
  %v756 = vmax.f32 %v638, 0.0
  %v757 = vmax.f32 %v643, 0.0
  %v758 = vmax.f32 %v646, 0.0
  %v759 = vmax.f32 %v651, 0.0
  %v760 = vmax.f32 %v654, 0.0
  %v761 = vmax.f32 %v659, 0.0
  %v762 = vmax.f32 %v662, 0.0
  %v763 = vmax.f32 %v667, 0.0
  %v764 = vmax.f32 %v670, 0.0
  %v765 = vmax.f32 %v675, 0.0
  %v766 = vmax.f32 %v678, 0.0
  %v767 = vmax.f32 %v683, 0.0
  %v768 = vmax.f32 %v686, 0.0
  %v769 = vmax.f32 %v691, 0.0
  %v770 = vmax.f32 %v694, 0.0
  %v771 = vmax.f32 %v699, 0.0
  %v772 = vmax.f32 %v702, 0.0
  %v773 = vmax.f32 %v707, 0.0
  %v774 = vmax.f32 %v710, 0.0
  %v775 = vmax.f32 %v715, 0.0
  %v776 = vmax.f32 %v718, 0.0
  %v777 = vmax.f32 %v723, 0.0
  %v778 = vmax.f32 %v726, 0.0
  %v779 = vmax.f32 %v731, 0.0
  %v780 = vmax.f32 %v734, 0.0
  %v781 = vmax.f32 %v739, 0.0
  %v782 = vmax.f32 %v742, 0.0
  %v783 = vmax.f32 %v747, 0.0
  %v784 = vmax.f32 %v750, 0.0
  %v785 = vpack.c.bf16 %v754, %v753
  %v786 = vpack.c.bf16 %v756, %v755
  %v787 = vpack.c.bf16 %v758, %v757
  %v788 = vpack.c.bf16 %v760, %v759
  %v789 = vpack.c.bf16 %v762, %v761
  %v790 = vpack.c.bf16 %v764, %v763
  %v791 = vpack.c.bf16 %v766, %v765
  %v792 = vpack.c.bf16 %v768, %v767
  %v793 = vpack.c.bf16 %v770, %v769
  %v794 = vpack.c.bf16 %v772, %v771
  %v795 = vpack.c.bf16 %v774, %v773
  %v796 = vpack.c.bf16 %v776, %v775
  %v797 = vpack.c.bf16 %v778, %v777
  %v798 = vpack.c.bf16 %v780, %v779
  %v799 = vpack.c.bf16 %v782, %v781
  %v800 = vpack.c.bf16 %v784, %v783
  %v801 = vld [vmem:[%s4] sm:$0xf]
  %v802 = vld [vmem:[%s4 + $0x4] sm:$0xf]
  %v803 = vld [vmem:[%s4 + $0x8] sm:$0xf]
  %v804 = vld [vmem:[%s4 + $0xc] sm:$0xf]
  %v805 = vld [vmem:[%s4 + $0x10] sm:$0xf]
  %v806 = vld [vmem:[%s4 + $0x14] sm:$0xf]
  %v807 = vld [vmem:[%s4 + $0x18] sm:$0xf]
  %v808 = vld [vmem:[%s4 + $0x1c] sm:$0xf]
  %v809 = vld [vmem:[%s4 + $0x20] sm:$0xf]
  %v810 = vld [vmem:[%s4 + $0x24] sm:$0xf]
  %v811 = vld [vmem:[%s4 + $0x28] sm:$0xf]
  %v812 = vld [vmem:[%s4 + $0x2c] sm:$0xf]
  %v813 = vld [vmem:[%s4 + $0x30] sm:$0xf]
  %v814 = vld [vmem:[%s4 + $0x34] sm:$0xf]
  %v815 = vld [vmem:[%s4 + $0x38] sm:$0xf]
  %v816 = vld [vmem:[%s4 + $0x3c] sm:$0xf]
  %v833 = vunpack.c.l.b16 %v801
  %v834 = vunpack.c.l.b16 %v802
  %v835 = vunpack.c.l.b16 %v803
  %v836 = vunpack.c.l.b16 %v804
  %v837 = vunpack.c.l.b16 %v805
  %v838 = vunpack.c.l.b16 %v806
  %v839 = vunpack.c.l.b16 %v807
  %v840 = vunpack.c.l.b16 %v808
  %v841 = vunpack.c.l.b16 %v809
  %v842 = vunpack.c.l.b16 %v810
  %v843 = vunpack.c.l.b16 %v811
  %v844 = vunpack.c.l.b16 %v812
  %v845 = vunpack.c.l.b16 %v813
  %v846 = vunpack.c.l.b16 %v814
  %v847 = vunpack.c.l.b16 %v815
  %v848 = vunpack.c.l.b16 %v816
  %v849 = vpack.c.b16 %v834, %v833
  %v850 = vpack.c.b16 %v836, %v835
  %v851 = vpack.c.b16 %v838, %v837
  %v852 = vpack.c.b16 %v840, %v839
  %v853 = vpack.c.b16 %v842, %v841
  %v854 = vpack.c.b16 %v844, %v843
  %v855 = vpack.c.b16 %v846, %v845
  %v856 = vpack.c.b16 %v848, %v847
  %865 = vmatprep.subr.bf16.mxu0 0
  %866 = vmatpush1.bf16.msra.mxu0 %v856
  %867 = vmatprep.subr.bf16.mxu0 0
  %868 = vmatpush1.bf16.msra.mxu0 %v855
  %869 = vmatprep.subr.bf16.mxu0 0
  %870 = vmatpush1.bf16.msra.mxu0 %v854
  %871 = vmatprep.subr.bf16.mxu0 0
  %872 = vmatpush1.bf16.msra.mxu0 %v853
  %873 = vmatprep.subr.bf16.mxu0 0
  %874 = vmatpush1.bf16.msra.mxu0 %v852
  %875 = vmatprep.subr.bf16.mxu0 0
  %876 = vmatpush1.bf16.msra.mxu0 %v851
  %877 = vmatprep.subr.bf16.mxu0 0
  %878 = vmatpush1.bf16.msra.mxu0 %v850
  %879 = vmatprep.subr.bf16.mxu0 0
  %880 = vmatpush1.bf16.msra.mxu0 %v849
  %881 = vmatprep.subr.bf16.mxu0 0
  %882 = vmatpush2.bf16.msra.mxu0 0
  %883 = vmatprep.subr.bf16.mxu0 0
  %884 = vmatpush2.bf16.msra.mxu0 0
  %885 = vmatprep.subr.bf16.mxu0 0
  %886 = vmatpush2.bf16.msra.mxu0 0
  %887 = vmatprep.subr.bf16.mxu0 0
  %888 = vmatpush2.bf16.msra.mxu0 0
  %889 = vmatprep.subr.bf16.mxu0 0
  %890 = vmatpush2.bf16.msra.mxu0 0
  %891 = vmatprep.subr.bf16.mxu0 0
  %892 = vmatpush2.bf16.msra.mxu0 0
  %893 = vmatprep.subr.bf16.mxu0 0
  %894 = vmatpush2.bf16.msra.mxu0 0
  %895 = vmatprep.subr.bf16.mxu0 0
  %896 = vmatpush2.bf16.msra.mxu0 0
  %897 = vmatprep.mubr.bf16.mxu0 0
  %898 = vmatmul.mubr.bf16.gmra.mxu0 %v785
  %v899 = vpop.f32.mrf.mxu0
  %v900 = vadd.f32 0.0, %v899
  %v901 = vpop.f32.mrf.mxu0
  %v902 = vpop.f32.mrf.mxu0
  %v903 = vadd.f32 0.0, %v902
  %v904 = vpop.f32.mrf.mxu0
  %905 = vmatprep.mubr.bf16.mxu0 0
  %906 = vmatmul.mubr.bf16.gmra.mxu0 %v786
  %v907 = vpop.f32.mrf.mxu0
  %v908 = vadd.f32 0.0, %v907
  %v909 = vpop.f32.mrf.mxu0
  %v910 = vpop.f32.mrf.mxu0
  %v911 = vadd.f32 0.0, %v910
  %v912 = vpop.f32.mrf.mxu0
  %913 = vmatprep.mubr.bf16.mxu0 0
  %914 = vmatmul.mubr.bf16.gmra.mxu0 %v787
  %v915 = vpop.f32.mrf.mxu0
  %v916 = vadd.f32 0.0, %v915
  %v917 = vpop.f32.mrf.mxu0
  %v918 = vpop.f32.mrf.mxu0
  %v919 = vadd.f32 0.0, %v918
  %v920 = vpop.f32.mrf.mxu0
  %921 = vmatprep.mubr.bf16.mxu0 0
  %922 = vmatmul.mubr.bf16.gmra.mxu0 %v788
  %v923 = vpop.f32.mrf.mxu0
  %v924 = vadd.f32 0.0, %v923
  %v925 = vpop.f32.mrf.mxu0
  %v926 = vpop.f32.mrf.mxu0
  %v927 = vadd.f32 0.0, %v926
  %v928 = vpop.f32.mrf.mxu0
  %929 = vmatprep.mubr.bf16.mxu0 0
  %930 = vmatmul.mubr.bf16.gmra.mxu0 %v789
  %v931 = vpop.f32.mrf.mxu0
  %v932 = vadd.f32 0.0, %v931
  %v933 = vpop.f32.mrf.mxu0
  %v934 = vpop.f32.mrf.mxu0
  %v935 = vadd.f32 0.0, %v934
  %v936 = vpop.f32.mrf.mxu0
  %937 = vmatprep.mubr.bf16.mxu0 0
  %938 = vmatmul.mubr.bf16.gmra.mxu0 %v790
  %v939 = vpop.f32.mrf.mxu0
  %v940 = vadd.f32 0.0, %v939
  %v941 = vpop.f32.mrf.mxu0
  %v942 = vpop.f32.mrf.mxu0
  %v943 = vadd.f32 0.0, %v942
  %v944 = vpop.f32.mrf.mxu0
  %945 = vmatprep.mubr.bf16.mxu0 0
  %946 = vmatmul.mubr.bf16.gmra.mxu0 %v791
  %v947 = vpop.f32.mrf.mxu0
  %v948 = vadd.f32 0.0, %v947
  %v949 = vpop.f32.mrf.mxu0
  %v950 = vpop.f32.mrf.mxu0
  %v951 = vadd.f32 0.0, %v950
  %v952 = vpop.f32.mrf.mxu0
  %953 = vmatprep.mubr.bf16.mxu0 0
  %954 = vmatmul.mubr.bf16.gmra.mxu0 %v792
  %v955 = vpop.f32.mrf.mxu0
  %v956 = vadd.f32 0.0, %v955
  %v957 = vpop.f32.mrf.mxu0
  %v958 = vpop.f32.mrf.mxu0
  %v959 = vadd.f32 0.0, %v958
  %v960 = vpop.f32.mrf.mxu0
  %961 = vmatprep.mubr.bf16.mxu0 0
  %962 = vmatmul.mubr.bf16.gmra.mxu0 %v793
  %v963 = vpop.f32.mrf.mxu0
  %v964 = vadd.f32 0.0, %v963
  %v965 = vpop.f32.mrf.mxu0
  %v966 = vpop.f32.mrf.mxu0
  %v967 = vadd.f32 0.0, %v966
  %v968 = vpop.f32.mrf.mxu0
  %969 = vmatprep.mubr.bf16.mxu0 0
  %970 = vmatmul.mubr.bf16.gmra.mxu0 %v794
  %v971 = vpop.f32.mrf.mxu0
  %v972 = vadd.f32 0.0, %v971
  %v973 = vpop.f32.mrf.mxu0
  %v974 = vpop.f32.mrf.mxu0
  %v975 = vadd.f32 0.0, %v974
  %v976 = vpop.f32.mrf.mxu0
  %977 = vmatprep.mubr.bf16.mxu0 0
  %978 = vmatmul.mubr.bf16.gmra.mxu0 %v795
  %v979 = vpop.f32.mrf.mxu0
  %v980 = vadd.f32 0.0, %v979
  %v981 = vpop.f32.mrf.mxu0
  %v982 = vpop.f32.mrf.mxu0
  %v983 = vadd.f32 0.0, %v982
  %v984 = vpop.f32.mrf.mxu0
  %985 = vmatprep.mubr.bf16.mxu0 0
  %986 = vmatmul.mubr.bf16.gmra.mxu0 %v796
  %v987 = vpop.f32.mrf.mxu0
  %v988 = vadd.f32 0.0, %v987
  %v989 = vpop.f32.mrf.mxu0
  %v990 = vpop.f32.mrf.mxu0
  %v991 = vadd.f32 0.0, %v990
  %v992 = vpop.f32.mrf.mxu0
  %993 = vmatprep.mubr.bf16.mxu0 0
  %994 = vmatmul.mubr.bf16.gmra.mxu0 %v797
  %v995 = vpop.f32.mrf.mxu0
  %v996 = vadd.f32 0.0, %v995
  %v997 = vpop.f32.mrf.mxu0
  %v998 = vpop.f32.mrf.mxu0
  %v999 = vadd.f32 0.0, %v998
  %v1000 = vpop.f32.mrf.mxu0
  %1001 = vmatprep.mubr.bf16.mxu0 0
  %1002 = vmatmul.mubr.bf16.gmra.mxu0 %v798
  %v1003 = vpop.f32.mrf.mxu0
  %v1004 = vadd.f32 0.0, %v1003
  %v1005 = vpop.f32.mrf.mxu0
  %v1006 = vpop.f32.mrf.mxu0
  %v1007 = vadd.f32 0.0, %v1006
  %v1008 = vpop.f32.mrf.mxu0
  %1009 = vmatprep.mubr.bf16.mxu0 0
  %1010 = vmatmul.mubr.bf16.gmra.mxu0 %v799
  %v1011 = vpop.f32.mrf.mxu0
  %v1012 = vadd.f32 0.0, %v1011
  %v1013 = vpop.f32.mrf.mxu0
  %v1014 = vpop.f32.mrf.mxu0
  %v1015 = vadd.f32 0.0, %v1014
  %v1016 = vpop.f32.mrf.mxu0
  %1017 = vmatprep.mubr.bf16.mxu0 0
  %1018 = vmatmul.mubr.bf16.gmra.mxu0 %v800
  %v1019 = vpop.f32.mrf.mxu0
  %v1020 = vadd.f32 0.0, %v1019
  %v1021 = vpop.f32.mrf.mxu0
  %v1022 = vpop.f32.mrf.mxu0
  %v1023 = vadd.f32 0.0, %v1022
  %v1024 = vpop.f32.mrf.mxu0
  %1025 = vdwg.mxu0
  %v1026 = vpack.c.bf16 %v903, %v900
  %v1027 = vpack.c.bf16 %v911, %v908
  %v1028 = vpack.c.bf16 %v919, %v916
  %v1029 = vpack.c.bf16 %v927, %v924
  %v1030 = vpack.c.bf16 %v935, %v932
  %v1031 = vpack.c.bf16 %v943, %v940
  %v1032 = vpack.c.bf16 %v951, %v948
  %v1033 = vpack.c.bf16 %v959, %v956
  %v1034 = vpack.c.bf16 %v967, %v964
  %v1035 = vpack.c.bf16 %v975, %v972
  %v1036 = vpack.c.bf16 %v983, %v980
  %v1037 = vpack.c.bf16 %v991, %v988
  %v1038 = vpack.c.bf16 %v999, %v996
  %v1039 = vpack.c.bf16 %v1007, %v1004
  %v1040 = vpack.c.bf16 %v1015, %v1012
  %v1041 = vpack.c.bf16 %v1023, %v1020
  %v1042 = vld [vmem:[%s5] sm:$0x1]
  %v1044 = vlaneseq
  %v1045 = vshrl.u32 %v1044, 7
  %v1046 = vsub.s32 0, %v1045
  %v1047 = vrot.slane %v1042, %v1046
  %1049 = vmatprep.subr.bf16.mxu0 0
  %1050 = vmatpush1.bf16.msra.mxu0 %v1033
  %1051 = vmatprep.subr.bf16.mxu0 0
  %1052 = vmatpush1.bf16.msra.mxu0 %v1032
  %1053 = vmatprep.subr.bf16.mxu0 0
  %1054 = vmatpush1.bf16.msra.mxu0 %v1031
  %1055 = vmatprep.subr.bf16.mxu0 0
  %1056 = vmatpush1.bf16.msra.mxu0 %v1030
  %1057 = vmatprep.subr.bf16.mxu0 0
  %1058 = vmatpush1.bf16.msra.mxu0 %v1029
  %1059 = vmatprep.subr.bf16.mxu0 0
  %1060 = vmatpush1.bf16.msra.mxu0 %v1028
  %1061 = vmatprep.subr.bf16.mxu0 0
  %1062 = vmatpush1.bf16.msra.mxu0 %v1027
  %1063 = vmatprep.subr.bf16.mxu0 0
  %1064 = vmatpush1.bf16.msra.mxu0 %v1026
  %1065 = vmatprep.subr.bf16.mxu0 0
  %1066 = vmatpush2.bf16.msra.mxu0 %v1041
  %1067 = vmatprep.subr.bf16.mxu0 0
  %1068 = vmatpush2.bf16.msra.mxu0 %v1040
  %1069 = vmatprep.subr.bf16.mxu0 0
  %1070 = vmatpush2.bf16.msra.mxu0 %v1039
  %1071 = vmatprep.subr.bf16.mxu0 0
  %1072 = vmatpush2.bf16.msra.mxu0 %v1038
  %1073 = vmatprep.subr.bf16.mxu0 0
  %1074 = vmatpush2.bf16.msra.mxu0 %v1037
  %1075 = vmatprep.subr.bf16.mxu0 0
  %1076 = vmatpush2.bf16.msra.mxu0 %v1036
  %1077 = vmatprep.subr.bf16.mxu0 0
  %1078 = vmatpush2.bf16.msra.mxu0 %v1035
  %1079 = vmatprep.subr.bf16.mxu0 0
  %1080 = vmatpush2.bf16.msra.mxu0 %v1034
  %1081 = vmatprep.mubr.bf16.mxu0 %v529
  %1082 = vmatmul.mubr.bf16.gmra.mxu0 %v528
  %v1083 = vpop.f32.mrf.mxu0
  %v1084 = vadd.f32 %v1047, %v1083
  %v1085 = vpop.f32.mrf.mxu0
  %v1086 = vpop.f32.mrf.mxu0
  %v1087 = vadd.f32 %v1047, %v1086
  %v1088 = vpop.f32.mrf.mxu0
  %1089 = vmatprep.mubr.bf16.mxu0 %v531
  %1090 = vmatmul.mubr.bf16.gmra.mxu0 %v530
  %v1091 = vpop.f32.mrf.mxu0
  %v1092 = vadd.f32 %v1047, %v1091
  %v1093 = vpop.f32.mrf.mxu0
  %v1094 = vpop.f32.mrf.mxu0
  %v1095 = vadd.f32 %v1047, %v1094
  %v1096 = vpop.f32.mrf.mxu0
  %1097 = vmatprep.mubr.bf16.mxu0 %v533
  %1098 = vmatmul.mubr.bf16.gmra.mxu0 %v532
  %v1099 = vpop.f32.mrf.mxu0
  %v1100 = vadd.f32 %v1047, %v1099
  %v1101 = vpop.f32.mrf.mxu0
  %v1102 = vpop.f32.mrf.mxu0
  %v1103 = vadd.f32 %v1047, %v1102
  %v1104 = vpop.f32.mrf.mxu0
  %1105 = vmatprep.mubr.bf16.mxu0 %v535
  %1106 = vmatmul.mubr.bf16.gmra.mxu0 %v534
  %v1107 = vpop.f32.mrf.mxu0
  %v1108 = vadd.f32 %v1047, %v1107
  %v1109 = vpop.f32.mrf.mxu0
  %v1110 = vpop.f32.mrf.mxu0
  %v1111 = vadd.f32 %v1047, %v1110
  %v1112 = vpop.f32.mrf.mxu0
  %1113 = vmatprep.mubr.bf16.mxu0 %v537
  %1114 = vmatmul.mubr.bf16.gmra.mxu0 %v536
  %v1115 = vpop.f32.mrf.mxu0
  %v1116 = vadd.f32 %v1047, %v1115
  %v1117 = vpop.f32.mrf.mxu0
  %v1118 = vpop.f32.mrf.mxu0
  %v1119 = vadd.f32 %v1047, %v1118
  %v1120 = vpop.f32.mrf.mxu0
  %1121 = vmatprep.mubr.bf16.mxu0 %v539
  %1122 = vmatmul.mubr.bf16.gmra.mxu0 %v538
  %v1123 = vpop.f32.mrf.mxu0
  %v1124 = vadd.f32 %v1047, %v1123
  %v1125 = vpop.f32.mrf.mxu0
  %v1126 = vpop.f32.mrf.mxu0
  %v1127 = vadd.f32 %v1047, %v1126
  %v1128 = vpop.f32.mrf.mxu0
  %1129 = vmatprep.mubr.bf16.mxu0 %v541
  %1130 = vmatmul.mubr.bf16.gmra.mxu0 %v540
  %v1131 = vpop.f32.mrf.mxu0
  %v1132 = vadd.f32 %v1047, %v1131
  %v1133 = vpop.f32.mrf.mxu0
  %v1134 = vpop.f32.mrf.mxu0
  %v1135 = vadd.f32 %v1047, %v1134
  %v1136 = vpop.f32.mrf.mxu0
  %1137 = vmatprep.mubr.bf16.mxu0 %v543
  %1138 = vmatmul.mubr.bf16.gmra.mxu0 %v542
  %v1139 = vpop.f32.mrf.mxu0
  %v1140 = vadd.f32 %v1047, %v1139
  %v1141 = vpop.f32.mrf.mxu0
  %v1142 = vpop.f32.mrf.mxu0
  %v1143 = vadd.f32 %v1047, %v1142
  %v1144 = vpop.f32.mrf.mxu0
  %1145 = vmatprep.mubr.bf16.mxu0 %v545
  %1146 = vmatmul.mubr.bf16.gmra.mxu0 %v544
  %v1147 = vpop.f32.mrf.mxu0
  %v1148 = vadd.f32 %v1047, %v1147
  %v1149 = vpop.f32.mrf.mxu0
  %v1150 = vpop.f32.mrf.mxu0
  %v1151 = vadd.f32 %v1047, %v1150
  %v1152 = vpop.f32.mrf.mxu0
  %1153 = vmatprep.mubr.bf16.mxu0 %v547
  %1154 = vmatmul.mubr.bf16.gmra.mxu0 %v546
  %v1155 = vpop.f32.mrf.mxu0
  %v1156 = vadd.f32 %v1047, %v1155
  %v1157 = vpop.f32.mrf.mxu0
  %v1158 = vpop.f32.mrf.mxu0
  %v1159 = vadd.f32 %v1047, %v1158
  %v1160 = vpop.f32.mrf.mxu0
  %1161 = vmatprep.mubr.bf16.mxu0 %v549
  %1162 = vmatmul.mubr.bf16.gmra.mxu0 %v548
  %v1163 = vpop.f32.mrf.mxu0
  %v1164 = vadd.f32 %v1047, %v1163
  %v1165 = vpop.f32.mrf.mxu0
  %v1166 = vpop.f32.mrf.mxu0
  %v1167 = vadd.f32 %v1047, %v1166
  %v1168 = vpop.f32.mrf.mxu0
  %1169 = vmatprep.mubr.bf16.mxu0 %v551
  %1170 = vmatmul.mubr.bf16.gmra.mxu0 %v550
  %v1171 = vpop.f32.mrf.mxu0
  %v1172 = vadd.f32 %v1047, %v1171
  %v1173 = vpop.f32.mrf.mxu0
  %v1174 = vpop.f32.mrf.mxu0
  %v1175 = vadd.f32 %v1047, %v1174
  %v1176 = vpop.f32.mrf.mxu0
  %1177 = vmatprep.mubr.bf16.mxu0 %v553
  %1178 = vmatmul.mubr.bf16.gmra.mxu0 %v552
  %v1179 = vpop.f32.mrf.mxu0
  %v1180 = vadd.f32 %v1047, %v1179
  %v1181 = vpop.f32.mrf.mxu0
  %v1182 = vpop.f32.mrf.mxu0
  %v1183 = vadd.f32 %v1047, %v1182
  %v1184 = vpop.f32.mrf.mxu0
  %1185 = vmatprep.mubr.bf16.mxu0 %v555
  %1186 = vmatmul.mubr.bf16.gmra.mxu0 %v554
  %v1187 = vpop.f32.mrf.mxu0
  %v1188 = vadd.f32 %v1047, %v1187
  %v1189 = vpop.f32.mrf.mxu0
  %v1190 = vpop.f32.mrf.mxu0
  %v1191 = vadd.f32 %v1047, %v1190
  %v1192 = vpop.f32.mrf.mxu0
  %1193 = vmatprep.mubr.bf16.mxu0 %v557
  %1194 = vmatmul.mubr.bf16.gmra.mxu0 %v556
  %v1195 = vpop.f32.mrf.mxu0
  %v1196 = vadd.f32 %v1047, %v1195
  %v1197 = vpop.f32.mrf.mxu0
  %v1198 = vpop.f32.mrf.mxu0
  %v1199 = vadd.f32 %v1047, %v1198
  %v1200 = vpop.f32.mrf.mxu0
  %1201 = vmatprep.mubr.bf16.mxu0 %v559
  %1202 = vmatmul.mubr.bf16.gmra.mxu0 %v558
  %v1203 = vpop.f32.mrf.mxu0
  %v1204 = vadd.f32 %v1047, %v1203
  %v1205 = vpop.f32.mrf.mxu0
  %v1206 = vpop.f32.mrf.mxu0
  %v1207 = vadd.f32 %v1047, %v1206
  %v1208 = vpop.f32.mrf.mxu0
  %1209 = vdwg.mxu0
  %v1210 = vlaneseq
  %v1211 = vand.u32 %v1210, 127
  %vm1212 = vcmp.lt.s32.totalorder %v1211, 7
  %v1213 = vsel %vm1212, %v1084, -1e+30
  %v1214 = vsel %vm1212, %v1087, -1e+30
  %v1215 = vsel %vm1212, %v1092, -1e+30
  %v1216 = vsel %vm1212, %v1095, -1e+30
  %v1217 = vsel %vm1212, %v1100, -1e+30
  %v1218 = vsel %vm1212, %v1103, -1e+30
  %v1219 = vsel %vm1212, %v1108, -1e+30
  %v1220 = vsel %vm1212, %v1111, -1e+30
  %v1221 = vsel %vm1212, %v1116, -1e+30
  %v1222 = vsel %vm1212, %v1119, -1e+30
  %v1223 = vsel %vm1212, %v1124, -1e+30
  %v1224 = vsel %vm1212, %v1127, -1e+30
  %v1225 = vsel %vm1212, %v1132, -1e+30
  %v1226 = vsel %vm1212, %v1135, -1e+30
  %v1227 = vsel %vm1212, %v1140, -1e+30
  %v1228 = vsel %vm1212, %v1143, -1e+30
  %v1229 = vsel %vm1212, %v1148, -1e+30
  %v1230 = vsel %vm1212, %v1151, -1e+30
  %v1231 = vsel %vm1212, %v1156, -1e+30
  %v1232 = vsel %vm1212, %v1159, -1e+30
  %v1233 = vsel %vm1212, %v1164, -1e+30
  %v1234 = vsel %vm1212, %v1167, -1e+30
  %v1235 = vsel %vm1212, %v1172, -1e+30
  %v1236 = vsel %vm1212, %v1175, -1e+30
  %v1237 = vsel %vm1212, %v1180, -1e+30
  %v1238 = vsel %vm1212, %v1183, -1e+30
  %v1239 = vsel %vm1212, %v1188, -1e+30
  %v1240 = vsel %vm1212, %v1191, -1e+30
  %v1241 = vsel %vm1212, %v1196, -1e+30
  %v1242 = vsel %vm1212, %v1199, -1e+30
  %v1243 = vsel %vm1212, %v1204, -1e+30
  %v1244 = vsel %vm1212, %v1207, -1e+30
  %1245 = vmax.xlane.f32.xlu0 %v1213
  %v1246 = vpop.xlane.xlu0 %1245
  %1247 = vmax.xlane.f32.xlu0 %v1214
  %v1248 = vpop.xlane.xlu0 %1247
  %1249 = vmax.xlane.f32.xlu0 %v1215
  %v1250 = vpop.xlane.xlu0 %1249
  %1251 = vmax.xlane.f32.xlu0 %v1216
  %v1252 = vpop.xlane.xlu0 %1251
  %1253 = vmax.xlane.f32.xlu0 %v1217
  %v1254 = vpop.xlane.xlu0 %1253
  %1255 = vmax.xlane.f32.xlu0 %v1218
  %v1256 = vpop.xlane.xlu0 %1255
  %1257 = vmax.xlane.f32.xlu0 %v1219
  %v1258 = vpop.xlane.xlu0 %1257
  %1259 = vmax.xlane.f32.xlu0 %v1220
  %v1260 = vpop.xlane.xlu0 %1259
  %1261 = vmax.xlane.f32.xlu0 %v1221
  %v1262 = vpop.xlane.xlu0 %1261
  %1263 = vmax.xlane.f32.xlu0 %v1222
  %v1264 = vpop.xlane.xlu0 %1263
  %1265 = vmax.xlane.f32.xlu0 %v1223
  %v1266 = vpop.xlane.xlu0 %1265
  %1267 = vmax.xlane.f32.xlu0 %v1224
  %v1268 = vpop.xlane.xlu0 %1267
  %1269 = vmax.xlane.f32.xlu0 %v1225
  %v1270 = vpop.xlane.xlu0 %1269
  %1271 = vmax.xlane.f32.xlu0 %v1226
  %v1272 = vpop.xlane.xlu0 %1271
  %1273 = vmax.xlane.f32.xlu0 %v1227
  %v1274 = vpop.xlane.xlu0 %1273
  %1275 = vmax.xlane.f32.xlu0 %v1228
  %v1276 = vpop.xlane.xlu0 %1275
  %1277 = vmax.xlane.f32.xlu0 %v1229
  %v1278 = vpop.xlane.xlu0 %1277
  %1279 = vmax.xlane.f32.xlu0 %v1230
  %v1280 = vpop.xlane.xlu0 %1279
  %1281 = vmax.xlane.f32.xlu0 %v1231
  %v1282 = vpop.xlane.xlu0 %1281
  %1283 = vmax.xlane.f32.xlu0 %v1232
  %v1284 = vpop.xlane.xlu0 %1283
  %1285 = vmax.xlane.f32.xlu0 %v1233
  %v1286 = vpop.xlane.xlu0 %1285
  %1287 = vmax.xlane.f32.xlu0 %v1234
  %v1288 = vpop.xlane.xlu0 %1287
  %1289 = vmax.xlane.f32.xlu0 %v1235
  %v1290 = vpop.xlane.xlu0 %1289
  %1291 = vmax.xlane.f32.xlu0 %v1236
  %v1292 = vpop.xlane.xlu0 %1291
  %1293 = vmax.xlane.f32.xlu0 %v1237
  %v1294 = vpop.xlane.xlu0 %1293
  %1295 = vmax.xlane.f32.xlu0 %v1238
  %v1296 = vpop.xlane.xlu0 %1295
  %1297 = vmax.xlane.f32.xlu0 %v1239
  %v1298 = vpop.xlane.xlu0 %1297
  %1299 = vmax.xlane.f32.xlu0 %v1240
  %v1300 = vpop.xlane.xlu0 %1299
  %1301 = vmax.xlane.f32.xlu0 %v1241
  %v1302 = vpop.xlane.xlu0 %1301
  %1303 = vmax.xlane.f32.xlu0 %v1242
  %v1304 = vpop.xlane.xlu0 %1303
  %1305 = vmax.xlane.f32.xlu0 %v1243
  %v1306 = vpop.xlane.xlu0 %1305
  %1307 = vmax.xlane.f32.xlu0 %v1244
  %v1308 = vpop.xlane.xlu0 %1307
  %v1309 = vsub.f32 %v1213, %v1246
  %v1310 = vsub.f32 %v1214, %v1248
  %v1311 = vsub.f32 %v1215, %v1250
  %v1312 = vsub.f32 %v1216, %v1252
  %v1313 = vsub.f32 %v1217, %v1254
  %v1314 = vsub.f32 %v1218, %v1256
  %v1315 = vsub.f32 %v1219, %v1258
  %v1316 = vsub.f32 %v1220, %v1260
  %v1317 = vsub.f32 %v1221, %v1262
  %v1318 = vsub.f32 %v1222, %v1264
  %v1319 = vsub.f32 %v1223, %v1266
  %v1320 = vsub.f32 %v1224, %v1268
  %v1321 = vsub.f32 %v1225, %v1270
  %v1322 = vsub.f32 %v1226, %v1272
  %v1323 = vsub.f32 %v1227, %v1274
  %v1324 = vsub.f32 %v1228, %v1276
  %v1325 = vsub.f32 %v1229, %v1278
  %v1326 = vsub.f32 %v1230, %v1280
  %v1327 = vsub.f32 %v1231, %v1282
  %v1328 = vsub.f32 %v1232, %v1284
  %v1329 = vsub.f32 %v1233, %v1286
  %v1330 = vsub.f32 %v1234, %v1288
  %v1331 = vsub.f32 %v1235, %v1290
  %v1332 = vsub.f32 %v1236, %v1292
  %v1333 = vsub.f32 %v1237, %v1294
  %v1334 = vsub.f32 %v1238, %v1296
  %v1335 = vsub.f32 %v1239, %v1298
  %v1336 = vsub.f32 %v1240, %v1300
  %v1337 = vsub.f32 %v1241, %v1302
  %v1338 = vsub.f32 %v1242, %v1304
  %v1339 = vsub.f32 %v1243, %v1306
  %v1340 = vsub.f32 %v1244, %v1308
  %v1341 = vmul.f32 %v1309, 1.442695
  %v1342 = vpow.pop %v1341
  %v1343 = vmul.f32 %v1310, 1.442695
  %v1344 = vpow.pop %v1343
  %v1345 = vmul.f32 %v1311, 1.442695
  %v1346 = vpow.pop %v1345
  %v1347 = vmul.f32 %v1312, 1.442695
  %v1348 = vpow.pop %v1347
  %v1349 = vmul.f32 %v1313, 1.442695
  %v1350 = vpow.pop %v1349
  %v1351 = vmul.f32 %v1314, 1.442695
  %v1352 = vpow.pop %v1351
  %v1353 = vmul.f32 %v1315, 1.442695
  %v1354 = vpow.pop %v1353
  %v1355 = vmul.f32 %v1316, 1.442695
  %v1356 = vpow.pop %v1355
  %v1357 = vmul.f32 %v1317, 1.442695
  %v1358 = vpow.pop %v1357
  %v1359 = vmul.f32 %v1318, 1.442695
  %v1360 = vpow.pop %v1359
  %v1361 = vmul.f32 %v1319, 1.442695
  %v1362 = vpow.pop %v1361
  %v1363 = vmul.f32 %v1320, 1.442695
  %v1364 = vpow.pop %v1363
  %v1365 = vmul.f32 %v1321, 1.442695
  %v1366 = vpow.pop %v1365
  %v1367 = vmul.f32 %v1322, 1.442695
  %v1368 = vpow.pop %v1367
  %v1369 = vmul.f32 %v1323, 1.442695
  %v1370 = vpow.pop %v1369
  %v1371 = vmul.f32 %v1324, 1.442695
  %v1372 = vpow.pop %v1371
  %v1373 = vmul.f32 %v1325, 1.442695
  %v1374 = vpow.pop %v1373
  %v1375 = vmul.f32 %v1326, 1.442695
  %v1376 = vpow.pop %v1375
  %v1377 = vmul.f32 %v1327, 1.442695
  %v1378 = vpow.pop %v1377
  %v1379 = vmul.f32 %v1328, 1.442695
  %v1380 = vpow.pop %v1379
  %v1381 = vmul.f32 %v1329, 1.442695
  %v1382 = vpow.pop %v1381
  %v1383 = vmul.f32 %v1330, 1.442695
  %v1384 = vpow.pop %v1383
  %v1385 = vmul.f32 %v1331, 1.442695
  %v1386 = vpow.pop %v1385
  %v1387 = vmul.f32 %v1332, 1.442695
  %v1388 = vpow.pop %v1387
  %v1389 = vmul.f32 %v1333, 1.442695
  %v1390 = vpow.pop %v1389
  %v1391 = vmul.f32 %v1334, 1.442695
  %v1392 = vpow.pop %v1391
  %v1393 = vmul.f32 %v1335, 1.442695
  %v1394 = vpow.pop %v1393
  %v1395 = vmul.f32 %v1336, 1.442695
  %v1396 = vpow.pop %v1395
  %v1397 = vmul.f32 %v1337, 1.442695
  %v1398 = vpow.pop %v1397
  %v1399 = vmul.f32 %v1338, 1.442695
  %v1400 = vpow.pop %v1399
  %v1401 = vmul.f32 %v1339, 1.442695
  %v1402 = vpow.pop %v1401
  %v1403 = vmul.f32 %v1340, 1.442695
  %v1404 = vpow.pop %v1403
  %v1405 = vsel %vm1212, %v1342, 0.0
  %v1406 = vsel %vm1212, %v1344, 0.0
  %v1407 = vsel %vm1212, %v1346, 0.0
  %v1408 = vsel %vm1212, %v1348, 0.0
  %v1409 = vsel %vm1212, %v1350, 0.0
  %v1410 = vsel %vm1212, %v1352, 0.0
  %v1411 = vsel %vm1212, %v1354, 0.0
  %v1412 = vsel %vm1212, %v1356, 0.0
  %v1413 = vsel %vm1212, %v1358, 0.0
  %v1414 = vsel %vm1212, %v1360, 0.0
  %v1415 = vsel %vm1212, %v1362, 0.0
  %v1416 = vsel %vm1212, %v1364, 0.0
  %v1417 = vsel %vm1212, %v1366, 0.0
  %v1418 = vsel %vm1212, %v1368, 0.0
  %v1419 = vsel %vm1212, %v1370, 0.0
  %v1420 = vsel %vm1212, %v1372, 0.0
  %v1421 = vsel %vm1212, %v1374, 0.0
  %v1422 = vsel %vm1212, %v1376, 0.0
  %v1423 = vsel %vm1212, %v1378, 0.0
  %v1424 = vsel %vm1212, %v1380, 0.0
  %v1425 = vsel %vm1212, %v1382, 0.0
  %v1426 = vsel %vm1212, %v1384, 0.0
  %v1427 = vsel %vm1212, %v1386, 0.0
  %v1428 = vsel %vm1212, %v1388, 0.0
  %v1429 = vsel %vm1212, %v1390, 0.0
  %v1430 = vsel %vm1212, %v1392, 0.0
  %v1431 = vsel %vm1212, %v1394, 0.0
  %v1432 = vsel %vm1212, %v1396, 0.0
  %v1433 = vsel %vm1212, %v1398, 0.0
  %v1434 = vsel %vm1212, %v1400, 0.0
  %v1435 = vsel %vm1212, %v1402, 0.0
  %v1436 = vsel %vm1212, %v1404, 0.0
  %1437 = vadd.xlane.f32.xlu0 %v1405
  %v1438 = vpop.xlane.xlu0 %1437
  %1439 = vadd.xlane.f32.xlu0 %v1406
  %v1440 = vpop.xlane.xlu0 %1439
  %1441 = vadd.xlane.f32.xlu0 %v1407
  %v1442 = vpop.xlane.xlu0 %1441
  %1443 = vadd.xlane.f32.xlu0 %v1408
  %v1444 = vpop.xlane.xlu0 %1443
  %1445 = vadd.xlane.f32.xlu0 %v1409
  %v1446 = vpop.xlane.xlu0 %1445
  %1447 = vadd.xlane.f32.xlu0 %v1410
  %v1448 = vpop.xlane.xlu0 %1447
  %1449 = vadd.xlane.f32.xlu0 %v1411
  %v1450 = vpop.xlane.xlu0 %1449
  %1451 = vadd.xlane.f32.xlu0 %v1412
  %v1452 = vpop.xlane.xlu0 %1451
  %1453 = vadd.xlane.f32.xlu0 %v1413
  %v1454 = vpop.xlane.xlu0 %1453
  %1455 = vadd.xlane.f32.xlu0 %v1414
  %v1456 = vpop.xlane.xlu0 %1455
  %1457 = vadd.xlane.f32.xlu0 %v1415
  %v1458 = vpop.xlane.xlu0 %1457
  %1459 = vadd.xlane.f32.xlu0 %v1416
  %v1460 = vpop.xlane.xlu0 %1459
  %1461 = vadd.xlane.f32.xlu0 %v1417
  %v1462 = vpop.xlane.xlu0 %1461
  %1463 = vadd.xlane.f32.xlu0 %v1418
  %v1464 = vpop.xlane.xlu0 %1463
  %1465 = vadd.xlane.f32.xlu0 %v1419
  %v1466 = vpop.xlane.xlu0 %1465
  %1467 = vadd.xlane.f32.xlu0 %v1420
  %v1468 = vpop.xlane.xlu0 %1467
  %1469 = vadd.xlane.f32.xlu0 %v1421
  %v1470 = vpop.xlane.xlu0 %1469
  %1471 = vadd.xlane.f32.xlu0 %v1422
  %v1472 = vpop.xlane.xlu0 %1471
  %1473 = vadd.xlane.f32.xlu0 %v1423
  %v1474 = vpop.xlane.xlu0 %1473
  %1475 = vadd.xlane.f32.xlu0 %v1424
  %v1476 = vpop.xlane.xlu0 %1475
  %1477 = vadd.xlane.f32.xlu0 %v1425
  %v1478 = vpop.xlane.xlu0 %1477
  %1479 = vadd.xlane.f32.xlu0 %v1426
  %v1480 = vpop.xlane.xlu0 %1479
  %1481 = vadd.xlane.f32.xlu0 %v1427
  %v1482 = vpop.xlane.xlu0 %1481
  %1483 = vadd.xlane.f32.xlu0 %v1428
  %v1484 = vpop.xlane.xlu0 %1483
  %1485 = vadd.xlane.f32.xlu0 %v1429
  %v1486 = vpop.xlane.xlu0 %1485
  %1487 = vadd.xlane.f32.xlu0 %v1430
  %v1488 = vpop.xlane.xlu0 %1487
  %1489 = vadd.xlane.f32.xlu0 %v1431
  %v1490 = vpop.xlane.xlu0 %1489
  %1491 = vadd.xlane.f32.xlu0 %v1432
  %v1492 = vpop.xlane.xlu0 %1491
  %1493 = vadd.xlane.f32.xlu0 %v1433
  %v1494 = vpop.xlane.xlu0 %1493
  %1495 = vadd.xlane.f32.xlu0 %v1434
  %v1496 = vpop.xlane.xlu0 %1495
  %1497 = vadd.xlane.f32.xlu0 %v1435
  %v1498 = vpop.xlane.xlu0 %1497
  %1499 = vadd.xlane.f32.xlu0 %v1436
  %v1500 = vpop.xlane.xlu0 %1499
  %v1501 = vlog2.pop %v1438
  %v1502 = vmul.f32 %v1501, 0.6931472
  %v1503 = vlog2.pop %v1440
  %v1504 = vmul.f32 %v1503, 0.6931472
  %v1505 = vlog2.pop %v1442
  %v1506 = vmul.f32 %v1505, 0.6931472
  %v1507 = vlog2.pop %v1444
  %v1508 = vmul.f32 %v1507, 0.6931472
  %v1509 = vlog2.pop %v1446
  %v1510 = vmul.f32 %v1509, 0.6931472
  %v1511 = vlog2.pop %v1448
  %v1512 = vmul.f32 %v1511, 0.6931472
  %v1513 = vlog2.pop %v1450
  %v1514 = vmul.f32 %v1513, 0.6931472
  %v1515 = vlog2.pop %v1452
  %v1516 = vmul.f32 %v1515, 0.6931472
  %v1517 = vlog2.pop %v1454
  %v1518 = vmul.f32 %v1517, 0.6931472
  %v1519 = vlog2.pop %v1456
  %v1520 = vmul.f32 %v1519, 0.6931472
  %v1521 = vlog2.pop %v1458
  %v1522 = vmul.f32 %v1521, 0.6931472
  %v1523 = vlog2.pop %v1460
  %v1524 = vmul.f32 %v1523, 0.6931472
  %v1525 = vlog2.pop %v1462
  %v1526 = vmul.f32 %v1525, 0.6931472
  %v1527 = vlog2.pop %v1464
  %v1528 = vmul.f32 %v1527, 0.6931472
  %v1529 = vlog2.pop %v1466
  %v1530 = vmul.f32 %v1529, 0.6931472
  %v1531 = vlog2.pop %v1468
  %v1532 = vmul.f32 %v1531, 0.6931472
  %v1533 = vlog2.pop %v1470
  %v1534 = vmul.f32 %v1533, 0.6931472
  %v1535 = vlog2.pop %v1472
  %v1536 = vmul.f32 %v1535, 0.6931472
  %v1537 = vlog2.pop %v1474
  %v1538 = vmul.f32 %v1537, 0.6931472
  %v1539 = vlog2.pop %v1476
  %v1540 = vmul.f32 %v1539, 0.6931472
  %v1541 = vlog2.pop %v1478
  %v1542 = vmul.f32 %v1541, 0.6931472
  %v1543 = vlog2.pop %v1480
  %v1544 = vmul.f32 %v1543, 0.6931472
  %v1545 = vlog2.pop %v1482
  %v1546 = vmul.f32 %v1545, 0.6931472
  %v1547 = vlog2.pop %v1484
  %v1548 = vmul.f32 %v1547, 0.6931472
  %v1549 = vlog2.pop %v1486
  %v1550 = vmul.f32 %v1549, 0.6931472
  %v1551 = vlog2.pop %v1488
  %v1552 = vmul.f32 %v1551, 0.6931472
  %v1553 = vlog2.pop %v1490
  %v1554 = vmul.f32 %v1553, 0.6931472
  %v1555 = vlog2.pop %v1492
  %v1556 = vmul.f32 %v1555, 0.6931472
  %v1557 = vlog2.pop %v1494
  %v1558 = vmul.f32 %v1557, 0.6931472
  %v1559 = vlog2.pop %v1496
  %v1560 = vmul.f32 %v1559, 0.6931472
  %v1561 = vlog2.pop %v1498
  %v1562 = vmul.f32 %v1561, 0.6931472
  %v1563 = vlog2.pop %v1500
  %v1564 = vmul.f32 %v1563, 0.6931472
  %v1565 = vsub.f32 %v1309, %v1502
  %v1566 = vsub.f32 %v1310, %v1504
  %v1567 = vsub.f32 %v1311, %v1506
  %v1568 = vsub.f32 %v1312, %v1508
  %v1569 = vsub.f32 %v1313, %v1510
  %v1570 = vsub.f32 %v1314, %v1512
  %v1571 = vsub.f32 %v1315, %v1514
  %v1572 = vsub.f32 %v1316, %v1516
  %v1573 = vsub.f32 %v1317, %v1518
  %v1574 = vsub.f32 %v1318, %v1520
  %v1575 = vsub.f32 %v1319, %v1522
  %v1576 = vsub.f32 %v1320, %v1524
  %v1577 = vsub.f32 %v1321, %v1526
  %v1578 = vsub.f32 %v1322, %v1528
  %v1579 = vsub.f32 %v1323, %v1530
  %v1580 = vsub.f32 %v1324, %v1532
  %v1581 = vsub.f32 %v1325, %v1534
  %v1582 = vsub.f32 %v1326, %v1536
  %v1583 = vsub.f32 %v1327, %v1538
  %v1584 = vsub.f32 %v1328, %v1540
  %v1585 = vsub.f32 %v1329, %v1542
  %v1586 = vsub.f32 %v1330, %v1544
  %v1587 = vsub.f32 %v1331, %v1546
  %v1588 = vsub.f32 %v1332, %v1548
  %v1589 = vsub.f32 %v1333, %v1550
  %v1590 = vsub.f32 %v1334, %v1552
  %v1591 = vsub.f32 %v1335, %v1554
  %v1592 = vsub.f32 %v1336, %v1556
  %v1593 = vsub.f32 %v1337, %v1558
  %v1594 = vsub.f32 %v1338, %v1560
  %v1595 = vsub.f32 %v1339, %v1562
  %v1596 = vsub.f32 %v1340, %v1564
  %v1597 = vsel %vm1212, %v1565, 0.0
  %v1598 = vsel %vm1212, %v1566, 0.0
  %v1599 = vsel %vm1212, %v1567, 0.0
  %v1600 = vsel %vm1212, %v1568, 0.0
  %v1601 = vsel %vm1212, %v1569, 0.0
  %v1602 = vsel %vm1212, %v1570, 0.0
  %v1603 = vsel %vm1212, %v1571, 0.0
  %v1604 = vsel %vm1212, %v1572, 0.0
  %v1605 = vsel %vm1212, %v1573, 0.0
  %v1606 = vsel %vm1212, %v1574, 0.0
  %v1607 = vsel %vm1212, %v1575, 0.0
  %v1608 = vsel %vm1212, %v1576, 0.0
  %v1609 = vsel %vm1212, %v1577, 0.0
  %v1610 = vsel %vm1212, %v1578, 0.0
  %v1611 = vsel %vm1212, %v1579, 0.0
  %v1612 = vsel %vm1212, %v1580, 0.0
  %v1613 = vsel %vm1212, %v1581, 0.0
  %v1614 = vsel %vm1212, %v1582, 0.0
  %v1615 = vsel %vm1212, %v1583, 0.0
  %v1616 = vsel %vm1212, %v1584, 0.0
  %v1617 = vsel %vm1212, %v1585, 0.0
  %v1618 = vsel %vm1212, %v1586, 0.0
  %v1619 = vsel %vm1212, %v1587, 0.0
  %v1620 = vsel %vm1212, %v1588, 0.0
  %v1621 = vsel %vm1212, %v1589, 0.0
  %v1622 = vsel %vm1212, %v1590, 0.0
  %v1623 = vsel %vm1212, %v1591, 0.0
  %v1624 = vsel %vm1212, %v1592, 0.0
  %v1625 = vsel %vm1212, %v1593, 0.0
  %v1626 = vsel %vm1212, %v1594, 0.0
  %v1627 = vsel %vm1212, %v1595, 0.0
  %v1628 = vsel %vm1212, %v1596, 0.0
  %1629 = vst [vmem:[%s6] sm:$0xff] %v1597
  %1630 = vst [vmem:[%s6 + $0x8] sm:$0xff] %v1598
  %1631 = vst [vmem:[%s6 + $0x10] sm:$0xff] %v1599
  %1632 = vst [vmem:[%s6 + $0x18] sm:$0xff] %v1600
  %1633 = vst [vmem:[%s6 + $0x20] sm:$0xff] %v1601
  %1634 = vst [vmem:[%s6 + $0x28] sm:$0xff] %v1602
  %1635 = vst [vmem:[%s6 + $0x30] sm:$0xff] %v1603
  %1636 = vst [vmem:[%s6 + $0x38] sm:$0xff] %v1604
  %1637 = vst [vmem:[%s6 + $0x40] sm:$0xff] %v1605
  %1638 = vst [vmem:[%s6 + $0x48] sm:$0xff] %v1606
  %1639 = vst [vmem:[%s6 + $0x50] sm:$0xff] %v1607
  %1640 = vst [vmem:[%s6 + $0x58] sm:$0xff] %v1608
  %1641 = vst [vmem:[%s6 + $0x60] sm:$0xff] %v1609
  %1642 = vst [vmem:[%s6 + $0x68] sm:$0xff] %v1610
  %1643 = vst [vmem:[%s6 + $0x70] sm:$0xff] %v1611
  %1644 = vst [vmem:[%s6 + $0x78] sm:$0xff] %v1612
  %1645 = vst [vmem:[%s6 + $0x80] sm:$0xff] %v1613
  %1646 = vst [vmem:[%s6 + $0x88] sm:$0xff] %v1614
  %1647 = vst [vmem:[%s6 + $0x90] sm:$0xff] %v1615
  %1648 = vst [vmem:[%s6 + $0x98] sm:$0xff] %v1616
  %1649 = vst [vmem:[%s6 + $0xa0] sm:$0xff] %v1617
  %1650 = vst [vmem:[%s6 + $0xa8] sm:$0xff] %v1618
  %1651 = vst [vmem:[%s6 + $0xb0] sm:$0xff] %v1619
  %1652 = vst [vmem:[%s6 + $0xb8] sm:$0xff] %v1620
  %1653 = vst [vmem:[%s6 + $0xc0] sm:$0xff] %v1621
  %1654 = vst [vmem:[%s6 + $0xc8] sm:$0xff] %v1622
  %1655 = vst [vmem:[%s6 + $0xd0] sm:$0xff] %v1623
  %1656 = vst [vmem:[%s6 + $0xd8] sm:$0xff] %v1624
  %1657 = vst [vmem:[%s6 + $0xe0] sm:$0xff] %v1625
  %1658 = vst [vmem:[%s6 + $0xe8] sm:$0xff] %v1626
  %1659 = vst [vmem:[%s6 + $0xf0] sm:$0xff] %v1627
  %1660 = vst [vmem:[%s6 + $0xf8] sm:$0xff] %v1628
  // Predicated region
  $region26: #{gcn_forward.1} parent=0 // pred_check
    _
  $region27: #{gcn_forward.1} parent=0 // pred_check_branch
    %1662 = sbr.rel (0) target = $region29
  $region28: #{gcn_forward.1} parent=0 // pred_region
    _
  $region29: #{gcn_forward.1} parent=0 // pred_fallthru
    _
  // Predicated region
  $region30: #{gcn_forward.1} parent=0 // pred_check
    _
  $region31: #{gcn_forward.1} parent=0 // pred_check_branch
    %1664 = sbr.rel (0) target = $region33
  $region32: #{gcn_forward.1} parent=0 // pred_region
    _
  $region33: #{gcn_forward.1} parent=0 // pred_fallthru
    _

</llo_original>
